<compile_context>
chip_gen: v5e
topology: v5e:2x2
jax: 0.10.0
libtpu: 0.0.40
codegen_flags: <defaults>
</compile_context>

<pallas_src>
import jax
import jax.numpy as jnp
from jax.experimental import pallas as pl
from jax.experimental.pallas import tpu as pltpu

LN_EPS = 1e-5  # PyTorch nn.LayerNorm default


def _round_up(x, m):
    return ((x + m - 1) // m) * m


def _layernorm_1pass(h, gamma, beta):
    """Single-pass LayerNorm: sum and sum-of-squares together, var = E[h^2] - mu^2."""
    n = h.shape[-1]
    inv_n = 1.0 / n
    s1 = jnp.sum(h, axis=-1, keepdims=True)
    s2 = jnp.sum(h * h, axis=-1, keepdims=True)
    mu = s1 * inv_n
    var = jnp.maximum(s2 * inv_n - mu * mu, 0.0)   # clamp: one-pass form can go slightly <0
    return (h - mu) * jax.lax.rsqrt(var + LN_EPS) * gamma + beta


def mlp_head_kernel(u_ref, it_ref, w1_ref, w2_ref, ln1_ref, ln2_ref, b3_ref, o_ref):
    # ---- resident parameters (constant index_map -> loaded once, stay in VMEM) ----
    w1 = w1_ref[...]                 # (2E, H)  bf16
    w2 = w2_ref[...]                 # (H, H2)  bf16
    b1 = ln1_ref[0:1, :]             # (1, H)   f32
    g1 = ln1_ref[1:2, :]
    be1 = ln1_ref[2:3, :]
    b2 = ln2_ref[0:1, :]             # (1, H2)  f32
    g2 = ln2_ref[1:2, :]
    be2 = ln2_ref[2:3, :]
    w3 = ln2_ref[3:4, :]             # (1, H2)  f32 (fc3 weight row, VPU reduce path)
    b3 = b3_ref[0]                   # scalar f32 from SMEM

    # ---- streamed activations: cast to bf16 in-kernel (no wrapper-side HBM pass) ----
    u = u_ref[...].astype(jnp.bfloat16)     # (TB, E)
    it = it_ref[...].astype(jnp.bfloat16)   # (TB, E)

    # fc1 on the never-HBM-materialized concat: one K=2E dot (fills MXU depth on v5e).
    x = jnp.concatenate([u, it], axis=-1)   # (TB, 2E), VMEM only
    h = jnp.dot(x, w1, preferred_element_type=jnp.float32) + b1
    h = _layernorm_1pass(h, g1, be1)
    h = jnp.maximum(h, 0.0)                 # ReLU (Dropout -> identity at inference)

    # fc2 + LayerNorm + ReLU.
    h = jnp.dot(h.astype(jnp.bfloat16), w2, preferred_element_type=jnp.float32) + b2
    h = _layernorm_1pass(h, g2, be2)
    h = jnp.maximum(h, 0.0)                 # ReLU (Dropout -> identity at inference)

    # fc3 (N=1): an MXU matmul would waste the unit -> VPU multiply + lane reduction.
    s = jnp.sum(h * w3, axis=-1)            # (TB,)
    tb = s.shape[0]
    o_ref[...] = jax.nn.sigmoid(s + b3).reshape(1, tb)   # explicit lane-dense (1, TB) store


def mlp_head(user_emb, item_emb, params, *, tb=2048):
    """Fused MLP head. user_emb/item_emb: (B, E) f32. Returns (B,) f32 scores."""
    B, E = user_emb.shape
    H = params["w1"].shape[1]
    H2 = params["w2"].shape[1]

    # Batch tile: multiple of 128 (lane-dense output), capped for VMEM / pipelining.
    TB = min(tb, _round_up(max(B, 1), 128))
    # v7x megacore: guarantee >= 2 grid steps when the batch allows it, so the
    # "parallel" axis can shard across both TensorCores.
    if pl.cdiv(B, TB) == 1 and B > 128:
        TB = _round_up(pl.cdiv(B, 2), 128)
    num_tiles = pl.cdiv(B, TB)   # ragged tail tile: OOB rows read garbage, discarded below

    # Tiny weight repacks (KB-scale, negligible): bf16 MXU operands + packed f32 LN slabs.
    w1 = params["w1"].astype(jnp.bfloat16)                      # (2E, H)
    w2 = params["w2"].astype(jnp.bfloat16)                      # (H, H2)
    ln1 = jnp.concatenate([params["b1"], params["g1"], params["be1"]], axis=0)  # (3, H)
    ln2 = jnp.concatenate([params["b2"], params["g2"], params["be2"],
                           jnp.reshape(params["w3"], (1, H2))], axis=0)          # (4, H2)
    b3 = jnp.reshape(params["b3"], (1,)).astype(jnp.float32)    # SMEM scalar

    args = (user_emb, item_emb, w1, w2, ln1, ln2, b3)

    def row_spec():
        return pl.BlockSpec((TB, E), lambda i: (i, 0))

    def resident_spec(x):
        # Constant block index -> stays resident in VMEM across grid steps.
        return pl.BlockSpec(x.shape, lambda i: (0, 0))

    in_specs = [
        row_spec(), row_spec(),
        resident_spec(w1), resident_spec(w2),
        resident_spec(ln1), resident_spec(ln2),
        pl.BlockSpec(memory_space=pltpu.MemorySpace.SMEM),      # b3 scalar
    ]

    out = pl.pallas_call(
        mlp_head_kernel,
        grid=(num_tiles,),
        out_shape=jax.ShapeDtypeStruct((num_tiles, TB), jnp.float32),
        in_specs=in_specs,
        out_specs=pl.BlockSpec((1, TB), lambda i: (i, 0)),
        compiler_params=pltpu.CompilerParams(
            dimension_semantics=("parallel",),          # megacore-shardable on v7x
            vmem_limit_bytes=32 * 1024 * 1024,          # safe on v7x's 64 MiB VMEM
        ),
    )(*args)

    return out.reshape(-1)[:B]


def gnn_recommender_forward(user_indices, item_indices, params):
    """Inference path of GNNRecommender.forward (edge_index=None, x=None)."""
    user_emb = jnp.take(params["user_emb"], user_indices, axis=0)   # (B, E) f32
    item_emb = jnp.take(params["item_emb"], item_indices, axis=0)   # (B, E) f32
    return mlp_head(user_emb, item_emb, params)                     # (B,)


def gnn_recommender_reference(user_indices, item_indices, params):
    """Pure-JAX f32 reference (mirrors the PyTorch module in eval mode)."""
    def ln(h, gamma, beta):
        mu = jnp.mean(h, axis=-1, keepdims=True)
        var = jnp.mean((h - mu) ** 2, axis=-1, keepdims=True)
        return (h - mu) * jax.lax.rsqrt(var + LN_EPS) * gamma + beta

    user_emb = jnp.take(params["user_emb"], user_indices, axis=0)
    item_emb = jnp.take(params["item_emb"], item_indices, axis=0)
    x = jnp.concatenate([user_emb, item_emb], axis=1)
    h = x @ params["w1"] + params["b1"]
    h = jnp.maximum(ln(h, params["g1"], params["be1"]), 0.0)
    h = h @ params["w2"] + params["b2"]
    h = jnp.maximum(ln(h, params["g2"], params["be2"]), 0.0)
    out = h @ params["w3"] + params["b3"]
    return jax.nn.sigmoid(out)[:, 0]


def init_params(key, n_users, n_items, emb_dim=64, hidden_dim=128):
    ks = jax.random.split(key, 8)

    def xavier(k, shape):
        fan_in, fan_out = shape[0], shape[1]
        limit = jnp.sqrt(6.0 / (fan_in + fan_out))
        return jax.random.uniform(k, shape, jnp.float32, -limit, limit)

    return {
        # Embedding tables — xavier_uniform (as in the PyTorch module).
        "user_emb": xavier(ks[0], (n_users + 1, emb_dim)),
        "item_emb": xavier(ks[1], (n_items + 1, emb_dim)),
        # fc1: Linear(2*emb_dim, hidden_dim) + LayerNorm(hidden_dim)
        "w1": xavier(ks[2], (emb_dim * 2, hidden_dim)),
        "b1": jnp.zeros((1, hidden_dim), jnp.float32),
        "g1": jnp.ones((1, hidden_dim), jnp.float32),
        "be1": jnp.zeros((1, hidden_dim), jnp.float32),
        # fc2: Linear(hidden_dim, hidden_dim // 2) + LayerNorm(hidden_dim // 2)
        "w2": xavier(ks[3], (hidden_dim, hidden_dim // 2)),
        "b2": jnp.zeros((1, hidden_dim // 2), jnp.float32),
        "g2": jnp.ones((1, hidden_dim // 2), jnp.float32),
        "be2": jnp.zeros((1, hidden_dim // 2), jnp.float32),
        # fc3: Linear(hidden_dim // 2, 1)
        "w3": xavier(ks[4], (hidden_dim // 2, 1)),
        "b3": jnp.zeros((1, 1), jnp.float32),
    }


if __name__ == "__main__":
    key = jax.random.PRNGKey(0)
    n_users, n_items = 16, 32
    emb_dim, hidden_dim = 64, 128
    batch = 8

    pkey, ukey, ikey = jax.random.split(key, 3)
    params = init_params(pkey, n_users, n_items, emb_dim, hidden_dim)

    user_indices = jax.random.randint(ukey, (batch,), 1, n_users + 1, jnp.int32)
    item_indices = jax.random.randint(ikey, (batch,), 1, n_items + 1, jnp.int32)

    out = jax.jit(gnn_recommender_forward)(user_indices, item_indices, params)
    out = jax.block_until_ready(out)
    ref = gnn_recommender_reference(user_indices, item_indices, params)

    assert out.shape == (batch,)
    assert bool(jnp.all((out >= 0.0) & (out <= 1.0)))
    err = float(jnp.max(jnp.abs(out - ref)))
    assert err < 2e-2, f"max abs err vs f32 reference = {err}"  # bf16 matmul tolerance
    print("KERNEL_OK")
</pallas_src>

<mosaic_0001>
module attributes {stable_mosaic.version = 11 : i64} {
  func.func @mlp_head_kernel(%arg0: i32, %arg1: memref<128x64xf32, #tpu.memory_space<vmem>>, %arg2: memref<128x64xf32, #tpu.memory_space<vmem>>, %arg3: memref<128x128xbf16, #tpu.memory_space<vmem>>, %arg4: memref<128x64xbf16, #tpu.memory_space<vmem>>, %arg5: memref<3x128xf32, #tpu.memory_space<vmem>>, %arg6: memref<4x64xf32, #tpu.memory_space<vmem>>, %arg7: memref<1xf32, #tpu.memory_space<smem>>, %arg8: memref<1x128xf32, #tpu.memory_space<vmem>>) attributes {dimension_semantics = [#tpu.dimension_semantics<parallel>], iteration_bounds = array<i64: 1>, scalar_prefetch = 0 : i64, scratch_operands = 0 : i64, tpu.core_type = #tpu.core_type<tc>, window_params = [{transform_indices = @transform_0, window_bounds = array<i64: 128, 64>}, {transform_indices = @transform_1, window_bounds = array<i64: 128, 64>}, {pipeline_mode = #tpu.pipeline_mode<synchronous>, transform_indices = @transform_2, window_bounds = array<i64: 128, 128>}, {pipeline_mode = #tpu.pipeline_mode<synchronous>, transform_indices = @transform_3, window_bounds = array<i64: 128, 64>}, {pipeline_mode = #tpu.pipeline_mode<synchronous>, transform_indices = @transform_4, window_bounds = array<i64: 3, 128>}, {pipeline_mode = #tpu.pipeline_mode<synchronous>, transform_indices = @transform_5, window_bounds = array<i64: 4, 64>}, {transform_indices = @transform_6, window_bounds = array<i64: 1>}, {transform_indices = @transform_7, window_bounds = array<i64: 1, 128>}]} {
    %c0 = arith.constant 0 : index
    %c0_0 = arith.constant 0 : index
    %0 = vector.load %arg3[%c0, %c0_0] : memref<128x128xbf16, #tpu.memory_space<vmem>>, vector<128x128xbf16>
    %c0_1 = arith.constant 0 : index
    %c0_2 = arith.constant 0 : index
    %1 = vector.load %arg4[%c0_1, %c0_2] : memref<128x64xbf16, #tpu.memory_space<vmem>>, vector<128x64xbf16>
    %c0_3 = arith.constant 0 : index
    %c0_4 = arith.constant 0 : index
    %2 = vector.load %arg5[%c0_3, %c0_4] : memref<3x128xf32, #tpu.memory_space<vmem>>, vector<1x128xf32>
    %c1 = arith.constant 1 : index
    %c0_5 = arith.constant 0 : index
    %3 = vector.load %arg5[%c1, %c0_5] : memref<3x128xf32, #tpu.memory_space<vmem>>, vector<1x128xf32>
    %c2 = arith.constant 2 : index
    %c0_6 = arith.constant 0 : index
    %4 = vector.load %arg5[%c2, %c0_6] : memref<3x128xf32, #tpu.memory_space<vmem>>, vector<1x128xf32>
    %c0_7 = arith.constant 0 : index
    %c0_8 = arith.constant 0 : index
    %5 = vector.load %arg6[%c0_7, %c0_8] : memref<4x64xf32, #tpu.memory_space<vmem>>, vector<1x64xf32>
    %c1_9 = arith.constant 1 : index
    %c0_10 = arith.constant 0 : index
    %6 = vector.load %arg6[%c1_9, %c0_10] : memref<4x64xf32, #tpu.memory_space<vmem>>, vector<1x64xf32>
    %c2_11 = arith.constant 2 : index
    %c0_12 = arith.constant 0 : index
    %7 = vector.load %arg6[%c2_11, %c0_12] : memref<4x64xf32, #tpu.memory_space<vmem>>, vector<1x64xf32>
    %c3 = arith.constant 3 : index
    %c0_13 = arith.constant 0 : index
    %8 = vector.load %arg6[%c3, %c0_13] : memref<4x64xf32, #tpu.memory_space<vmem>>, vector<1x64xf32>
    %c0_14 = arith.constant 0 : index
    %9 = memref.load %arg7[%c0_14] : memref<1xf32, #tpu.memory_space<smem>>
    %c0_15 = arith.constant 0 : index
    %c0_16 = arith.constant 0 : index
    %10 = vector.load %arg1[%c0_15, %c0_16] : memref<128x64xf32, #tpu.memory_space<vmem>>, vector<128x64xf32>
    %11 = arith.truncf %10 : vector<128x64xf32> to vector<128x64xbf16>
    %c0_17 = arith.constant 0 : index
    %c0_18 = arith.constant 0 : index
    %12 = vector.load %arg2[%c0_17, %c0_18] : memref<128x64xf32, #tpu.memory_space<vmem>>, vector<128x64xf32>
    %13 = arith.truncf %12 : vector<128x64xf32> to vector<128x64xbf16>
    %14 = tpu.concatenate %11, %13 in 1 : vector<128x64xbf16>, vector<128x64xbf16> -> vector<128x128xbf16>
    %cst = arith.constant dense<0.000000e+00> : vector<128x128xf32>
    %15 = tpu.matmul %14, %0, %cst {dimension_numbers = #tpu.dot_dimension_numbers<[1], [0], [0], [1], [0, 0, 1, 1], [], []>} : vector<128x128xbf16>, vector<128x128xbf16>, vector<128x128xf32> -> vector<128x128xf32>
    %16 = vector.broadcast %2 : vector<1x128xf32> to vector<128x128xf32>
    %17 = arith.addf %15, %16 : vector<128x128xf32>
    %cst_19 = arith.constant dense<0.000000e+00> : vector<128xf32>
    %18 = vector.multi_reduction <add>, %17, %cst_19 [1] : vector<128x128xf32> to vector<128xf32>
    %19 = vector.shape_cast %18 : vector<128xf32> to vector<128x1xf32>
    %20 = arith.mulf %17, %17 : vector<128x128xf32>
    %cst_20 = arith.constant dense<0.000000e+00> : vector<128xf32>
    %21 = vector.multi_reduction <add>, %20, %cst_20 [1] : vector<128x128xf32> to vector<128xf32>
    %22 = vector.shape_cast %21 : vector<128xf32> to vector<128x1xf32>
    %cst_21 = arith.constant 7.812500e-03 : f32
    %23 = vector.broadcast %cst_21 : f32 to vector<128x1xf32>
    %24 = arith.mulf %19, %23 : vector<128x1xf32>
    %cst_22 = arith.constant 7.812500e-03 : f32
    %25 = vector.broadcast %cst_22 : f32 to vector<128x1xf32>
    %26 = arith.mulf %22, %25 : vector<128x1xf32>
    %27 = arith.mulf %24, %24 : vector<128x1xf32>
    %28 = arith.subf %26, %27 : vector<128x1xf32>
    %cst_23 = arith.constant 0.000000e+00 : f32
    %29 = vector.broadcast %cst_23 : f32 to vector<128x1xf32>
    %30 = arith.maximumf %28, %29 : vector<128x1xf32>
    %31 = vector.broadcast %24 : vector<128x1xf32> to vector<128x128xf32>
    %32 = arith.subf %17, %31 : vector<128x128xf32>
    %cst_24 = arith.constant 9.99999974E-6 : f32
    %33 = vector.broadcast %cst_24 : f32 to vector<128x1xf32>
    %34 = arith.addf %30, %33 : vector<128x1xf32>
    %35 = math.rsqrt %34 : vector<128x1xf32>
    %36 = vector.broadcast %35 : vector<128x1xf32> to vector<128x128xf32>
    %37 = arith.mulf %32, %36 : vector<128x128xf32>
    %38 = vector.broadcast %3 : vector<1x128xf32> to vector<128x128xf32>
    %39 = arith.mulf %37, %38 : vector<128x128xf32>
    %40 = vector.broadcast %4 : vector<1x128xf32> to vector<128x128xf32>
    %41 = arith.addf %39, %40 : vector<128x128xf32>
    %cst_25 = arith.constant 0.000000e+00 : f32
    %42 = vector.broadcast %cst_25 : f32 to vector<128x128xf32>
    %43 = arith.maximumf %41, %42 : vector<128x128xf32>
    %44 = arith.truncf %43 : vector<128x128xf32> to vector<128x128xbf16>
    %cst_26 = arith.constant dense<0.000000e+00> : vector<128x64xf32>
    %45 = tpu.matmul %44, %1, %cst_26 {dimension_numbers = #tpu.dot_dimension_numbers<[1], [0], [0], [1], [0, 0, 1, 1], [], []>} : vector<128x128xbf16>, vector<128x64xbf16>, vector<128x64xf32> -> vector<128x64xf32>
    %46 = vector.broadcast %5 : vector<1x64xf32> to vector<128x64xf32>
    %47 = arith.addf %45, %46 : vector<128x64xf32>
    %cst_27 = arith.constant dense<0.000000e+00> : vector<128xf32>
    %48 = vector.multi_reduction <add>, %47, %cst_27 [1] : vector<128x64xf32> to vector<128xf32>
    %49 = vector.shape_cast %48 : vector<128xf32> to vector<128x1xf32>
    %50 = arith.mulf %47, %47 : vector<128x64xf32>
    %cst_28 = arith.constant dense<0.000000e+00> : vector<128xf32>
    %51 = vector.multi_reduction <add>, %50, %cst_28 [1] : vector<128x64xf32> to vector<128xf32>
    %52 = vector.shape_cast %51 : vector<128xf32> to vector<128x1xf32>
    %cst_29 = arith.constant 1.562500e-02 : f32
    %53 = vector.broadcast %cst_29 : f32 to vector<128x1xf32>
    %54 = arith.mulf %49, %53 : vector<128x1xf32>
    %cst_30 = arith.constant 1.562500e-02 : f32
    %55 = vector.broadcast %cst_30 : f32 to vector<128x1xf32>
    %56 = arith.mulf %52, %55 : vector<128x1xf32>
    %57 = arith.mulf %54, %54 : vector<128x1xf32>
    %58 = arith.subf %56, %57 : vector<128x1xf32>
    %cst_31 = arith.constant 0.000000e+00 : f32
    %59 = vector.broadcast %cst_31 : f32 to vector<128x1xf32>
    %60 = arith.maximumf %58, %59 : vector<128x1xf32>
    %61 = vector.broadcast %54 : vector<128x1xf32> to vector<128x64xf32>
    %62 = arith.subf %47, %61 : vector<128x64xf32>
    %cst_32 = arith.constant 9.99999974E-6 : f32
    %63 = vector.broadcast %cst_32 : f32 to vector<128x1xf32>
    %64 = arith.addf %60, %63 : vector<128x1xf32>
    %65 = math.rsqrt %64 : vector<128x1xf32>
    %66 = vector.broadcast %65 : vector<128x1xf32> to vector<128x64xf32>
    %67 = arith.mulf %62, %66 : vector<128x64xf32>
    %68 = vector.broadcast %6 : vector<1x64xf32> to vector<128x64xf32>
    %69 = arith.mulf %67, %68 : vector<128x64xf32>
    %70 = vector.broadcast %7 : vector<1x64xf32> to vector<128x64xf32>
    %71 = arith.addf %69, %70 : vector<128x64xf32>
    %cst_33 = arith.constant 0.000000e+00 : f32
    %72 = vector.broadcast %cst_33 : f32 to vector<128x64xf32>
    %73 = arith.maximumf %71, %72 : vector<128x64xf32>
    %74 = vector.broadcast %8 : vector<1x64xf32> to vector<128x64xf32>
    %75 = arith.mulf %73, %74 : vector<128x64xf32>
    %cst_34 = arith.constant dense<0.000000e+00> : vector<128xf32>
    %76 = vector.multi_reduction <add>, %75, %cst_34 [1] : vector<128x64xf32> to vector<128xf32>
    %77 = vector.broadcast %9 : f32 to vector<128xf32>
    %78 = arith.addf %76, %77 : vector<128xf32>
    %79 = arith.negf %78 : vector<128xf32>
    %80 = math.exp %79 : vector<128xf32>
    %cst_35 = arith.constant 1.000000e+00 : f32
    %81 = vector.broadcast %cst_35 : f32 to vector<128xf32>
    %82 = arith.addf %81, %80 : vector<128xf32>
    %83 = arith.divf %81, %82 : vector<128xf32>
    %84 = vector.shape_cast %83 : vector<128xf32> to vector<1x128xf32>
    %c0_36 = arith.constant 0 : index
    %c0_37 = arith.constant 0 : index
    %85 = vector.load %arg8[%c0_36, %c0_37] : memref<1x128xf32, #tpu.memory_space<vmem>>, vector<1x128xf32>
    tpu.vector_store %arg8[%c0_36, %c0_37], %84 {strides = array<i32>} : memref<1x128xf32, #tpu.memory_space<vmem>>, vector<1x128xf32>,
    return
  }
  func.func @transform_0(%arg0: i32) -> (i32, i32) {
    %c0_i32 = arith.constant 0 : i32
    %c0_i32_0 = arith.constant 0 : i32
    return %arg0, %c0_i32 : i32, i32
  }
  func.func @transform_1(%arg0: i32) -> (i32, i32) {
    %c0_i32 = arith.constant 0 : i32
    %c0_i32_0 = arith.constant 0 : i32
    return %arg0, %c0_i32 : i32, i32
  }
  func.func @transform_2(%arg0: i32) -> (i32, i32) {
    %c0_i32 = arith.constant 0 : i32
    %c0_i32_0 = arith.constant 0 : i32
    %c0_i32_1 = arith.constant 0 : i32
    return %c0_i32, %c0_i32_0 : i32, i32
  }
  func.func @transform_3(%arg0: i32) -> (i32, i32) {
    %c0_i32 = arith.constant 0 : i32
    %c0_i32_0 = arith.constant 0 : i32
    %c0_i32_1 = arith.constant 0 : i32
    return %c0_i32, %c0_i32_0 : i32, i32
  }
  func.func @transform_4(%arg0: i32) -> (i32, i32) {
    %c0_i32 = arith.constant 0 : i32
    %c0_i32_0 = arith.constant 0 : i32
    %c0_i32_1 = arith.constant 0 : i32
    return %c0_i32, %c0_i32_0 : i32, i32
  }
  func.func @transform_5(%arg0: i32) -> (i32, i32) {
    %c0_i32 = arith.constant 0 : i32
    %c0_i32_0 = arith.constant 0 : i32
    %c0_i32_1 = arith.constant 0 : i32
    return %c0_i32, %c0_i32_0 : i32, i32
  }
  func.func @transform_6(%arg0: i32) -> i32 {
    %c0_i32 = arith.constant 0 : i32
    %c0_i32_0 = arith.constant 0 : i32
    return %c0_i32 : i32
  }
  func.func @transform_7(%arg0: i32) -> (i32, i32) {
    %c0_i32 = arith.constant 0 : i32
    %c0_i32_0 = arith.constant 0 : i32
    return %arg0, %c0_i32 : i32, i32
  }
}

</mosaic_0001>

<llo_original>
// kernel: gnn_recommender_forward.1
$region0: #{gnn_recommender_forward.1}
  #allocation0 [shape = 'u32[]', space=smem, size = 0x4, offset = 0x4, fixed_abs, tag = 'smem constant byte address 0x4 - core index']
  #allocation1 [shape = 'u32[72,128]{1,0:T(1,128)}', space=vmem, size = 0x9000, scoped, tag = 'internal scratch']
  #allocation2 [shape = 'f32[1]{0:T(128)S(6)}', space=smem, size = 0x200, scoped, tag = 'scoped memory for gnn_recommender_forward.1']
  %s0 = inlined_call_operand.vmem [shape: f32[8,64], index: 0, kind: input, shape index: {}]
  %s1 = inlined_call_operand.vmem [shape: f32[8,64], index: 1, kind: input, shape index: {}]
  %s2 = inlined_call_operand.vmem [shape: bf16[128,128], index: 2, kind: input, shape index: {}]
  %s3 = inlined_call_operand.vmem [shape: bf16[128,64], index: 3, kind: input, shape index: {}]
  %s4 = inlined_call_operand.vmem [shape: f32[3,128], index: 4, kind: input, shape index: {}]
  %s5 = inlined_call_operand.vmem [shape: f32[4,64], index: 5, kind: input, shape index: {}]
  %s6 = inlined_call_operand.<no memory space> [shape: f32[1], index: 6, kind: input, shape index: {}]
  %s7 = inlined_call_operand.vmem [shape: f32[1,128], index: 7, kind: output, shape index: {}]
  %s8 = sld [smem:[#allocation0]]
  $region38: #{gnn_recommender_forward.1} parent=0
    _
  %s10 = ssub.s32 1, %s8
  %s11 = scalar_select 0, %s10, %s8
  %12 = sst [smem:[#allocation2]] %s6
  // Predicated region
  $region2: #{gnn_recommender_forward.1} parent=0 // pred_check
    _
  $region3: #{gnn_recommender_forward.1} parent=0 // pred_check_branch
    %14 = sbr.rel (0) target = $region5
  $region4: #{gnn_recommender_forward.1} parent=0 // pred_region
    _
  $region5: #{gnn_recommender_forward.1} parent=0 // pred_fallthru
    _
  // Predicated region
  $region6: #{gnn_recommender_forward.1} parent=0 // pred_check
    _
  $region7: #{gnn_recommender_forward.1} parent=0 // pred_check_branch
    %16 = sbr.rel (0) target = $region9
  $region8: #{gnn_recommender_forward.1} parent=0 // pred_region
    _
  $region9: #{gnn_recommender_forward.1} parent=0 // pred_fallthru
    _
  // Predicated region
  $region10: #{gnn_recommender_forward.1} parent=0 // pred_check
    _
  $region11: #{gnn_recommender_forward.1} parent=0 // pred_check_branch
    %18 = sbr.rel (0) target = $region13
  $region12: #{gnn_recommender_forward.1} parent=0 // pred_region
    _
  $region13: #{gnn_recommender_forward.1} parent=0 // pred_fallthru
    _
  // Predicated region
  $region14: #{gnn_recommender_forward.1} parent=0 // pred_check
    _
  $region15: #{gnn_recommender_forward.1} parent=0 // pred_check_branch
    %20 = sbr.rel (0) target = $region17
  $region16: #{gnn_recommender_forward.1} parent=0 // pred_region
    _
  $region17: #{gnn_recommender_forward.1} parent=0 // pred_fallthru
    _
  // Predicated region
  $region18: #{gnn_recommender_forward.1} parent=0 // pred_check
    _
  $region19: #{gnn_recommender_forward.1} parent=0 // pred_check_branch
    %22 = sbr.rel (0) target = $region21
  $region20: #{gnn_recommender_forward.1} parent=0 // pred_region
    _
  $region21: #{gnn_recommender_forward.1} parent=0 // pred_fallthru
    _
  // Predicated region
  $region22: #{gnn_recommender_forward.1} parent=0 // pred_check
    _
  $region23: #{gnn_recommender_forward.1} parent=0 // pred_check_branch
    %24 = sbr.rel (0) target = $region25
  $region24: #{gnn_recommender_forward.1} parent=0 // pred_region
    _
  $region25: #{gnn_recommender_forward.1} parent=0 // pred_fallthru
    _
  // Predicated region
  $region26: #{gnn_recommender_forward.1} parent=0 // pred_check
    _
  $region27: #{gnn_recommender_forward.1} parent=0 // pred_check_branch
    %26 = sbr.rel (0) target = $region29
  $region28: #{gnn_recommender_forward.1} parent=0 // pred_region
    _
  $region29: #{gnn_recommender_forward.1} parent=0 // pred_fallthru
    _
  %v27 = vld [vmem:[%s2] sm:$0xf]
  %v28 = vld [vmem:[%s2 + $0x4] sm:$0xf]
  %v29 = vld [vmem:[%s2 + $0x8] sm:$0xf]
  %v30 = vld [vmem:[%s2 + $0xc] sm:$0xf]
  %v31 = vld [vmem:[%s2 + $0x10] sm:$0xf]
  %v32 = vld [vmem:[%s2 + $0x14] sm:$0xf]
  %v33 = vld [vmem:[%s2 + $0x18] sm:$0xf]
  %v34 = vld [vmem:[%s2 + $0x1c] sm:$0xf]
  %v35 = vld [vmem:[%s2 + $0x20] sm:$0xf]
  %v36 = vld [vmem:[%s2 + $0x24] sm:$0xf]
  %v37 = vld [vmem:[%s2 + $0x28] sm:$0xf]
  %v38 = vld [vmem:[%s2 + $0x2c] sm:$0xf]
  %v39 = vld [vmem:[%s2 + $0x30] sm:$0xf]
  %v40 = vld [vmem:[%s2 + $0x34] sm:$0xf]
  %v41 = vld [vmem:[%s2 + $0x38] sm:$0xf]
  %v42 = vld [vmem:[%s2 + $0x3c] sm:$0xf]
  %v43 = vld [vmem:[%s3] sm:$0xf]
  %v44 = vld [vmem:[%s3 + $0x4] sm:$0xf]
  %v45 = vld [vmem:[%s3 + $0x8] sm:$0xf]
  %v46 = vld [vmem:[%s3 + $0xc] sm:$0xf]
  %v47 = vld [vmem:[%s3 + $0x10] sm:$0xf]
  %v48 = vld [vmem:[%s3 + $0x14] sm:$0xf]
  %v49 = vld [vmem:[%s3 + $0x18] sm:$0xf]
  %v50 = vld [vmem:[%s3 + $0x1c] sm:$0xf]
  %v51 = vld [vmem:[%s3 + $0x20] sm:$0xf]
  %v52 = vld [vmem:[%s3 + $0x24] sm:$0xf]
  %v53 = vld [vmem:[%s3 + $0x28] sm:$0xf]
  %v54 = vld [vmem:[%s3 + $0x2c] sm:$0xf]
  %v55 = vld [vmem:[%s3 + $0x30] sm:$0xf]
  %v56 = vld [vmem:[%s3 + $0x34] sm:$0xf]
  %v57 = vld [vmem:[%s3 + $0x38] sm:$0xf]
  %v58 = vld [vmem:[%s3 + $0x3c] sm:$0xf]
  %v59 = vld [vmem:[%s4] sm:$0x1]
  %v60 = vld [vmem:[%s4 + $0x1] sm:$0x1]
  %v61 = vld [vmem:[%s4 + $0x2] sm:$0x1]
  %v62 = vld [vmem:[%s5] sm:$0x1]
  %v63 = vld [vmem:[%s5 + $0x1] sm:$0x1]
  %v64 = vld [vmem:[%s5 + $0x2] sm:$0x1]
  %v65 = vld [vmem:[%s5 + $0x3] sm:$0x1]
  %s66 = sld [smem:[#allocation2]]
  %v67 = vld [vmem:[%s0] sm:$0xff]
  %v68 = vld [vmem:[%s0 + $0x8] sm:$0xff]
  %v69 = vld [vmem:[%s0 + $0x10] sm:$0xff]
  %v70 = vld [vmem:[%s0 + $0x18] sm:$0xff]
  %v71 = vld [vmem:[%s0 + $0x20] sm:$0xff]
  %v72 = vld [vmem:[%s0 + $0x28] sm:$0xff]
  %v73 = vld [vmem:[%s0 + $0x30] sm:$0xff]
  %v74 = vld [vmem:[%s0 + $0x38] sm:$0xff]
  %v75 = vld [vmem:[%s0 + $0x40] sm:$0xff]
  %v76 = vld [vmem:[%s0 + $0x48] sm:$0xff]
  %v77 = vld [vmem:[%s0 + $0x50] sm:$0xff]
  %v78 = vld [vmem:[%s0 + $0x58] sm:$0xff]
  %v79 = vld [vmem:[%s0 + $0x60] sm:$0xff]
  %v80 = vld [vmem:[%s0 + $0x68] sm:$0xff]
  %v81 = vld [vmem:[%s0 + $0x70] sm:$0xff]
  %v82 = vld [vmem:[%s0 + $0x78] sm:$0xff]
  %v83 = vpack.c.bf16 %v67, %v67
  %v84 = vpack.c.bf16 %v68, %v68
  %v85 = vpack.c.bf16 %v69, %v69
  %v86 = vpack.c.bf16 %v70, %v70
  %v87 = vpack.c.bf16 %v71, %v71
  %v88 = vpack.c.bf16 %v72, %v72
  %v89 = vpack.c.bf16 %v73, %v73
  %v90 = vpack.c.bf16 %v74, %v74
  %v91 = vpack.c.bf16 %v75, %v75
  %v92 = vpack.c.bf16 %v76, %v76
  %v93 = vpack.c.bf16 %v77, %v77
  %v94 = vpack.c.bf16 %v78, %v78
  %v95 = vpack.c.bf16 %v79, %v79
  %v96 = vpack.c.bf16 %v80, %v80
  %v97 = vpack.c.bf16 %v81, %v81
  %v98 = vpack.c.bf16 %v82, %v82
  %v99 = vld [vmem:[%s1] sm:$0xff]
  %v100 = vld [vmem:[%s1 + $0x8] sm:$0xff]
  %v101 = vld [vmem:[%s1 + $0x10] sm:$0xff]
  %v102 = vld [vmem:[%s1 + $0x18] sm:$0xff]
  %v103 = vld [vmem:[%s1 + $0x20] sm:$0xff]
  %v104 = vld [vmem:[%s1 + $0x28] sm:$0xff]
  %v105 = vld [vmem:[%s1 + $0x30] sm:$0xff]
  %v106 = vld [vmem:[%s1 + $0x38] sm:$0xff]
  %v107 = vld [vmem:[%s1 + $0x40] sm:$0xff]
  %v108 = vld [vmem:[%s1 + $0x48] sm:$0xff]
  %v109 = vld [vmem:[%s1 + $0x50] sm:$0xff]
  %v110 = vld [vmem:[%s1 + $0x58] sm:$0xff]
  %v111 = vld [vmem:[%s1 + $0x60] sm:$0xff]
  %v112 = vld [vmem:[%s1 + $0x68] sm:$0xff]
  %v113 = vld [vmem:[%s1 + $0x70] sm:$0xff]
  %v114 = vld [vmem:[%s1 + $0x78] sm:$0xff]
  %v115 = vpack.c.bf16 %v99, %v99
  %v116 = vpack.c.bf16 %v100, %v100
  %v117 = vpack.c.bf16 %v101, %v101
  %v118 = vpack.c.bf16 %v102, %v102
  %v119 = vpack.c.bf16 %v103, %v103
  %v120 = vpack.c.bf16 %v104, %v104
  %v121 = vpack.c.bf16 %v105, %v105
  %v122 = vpack.c.bf16 %v106, %v106
  %v123 = vpack.c.bf16 %v107, %v107
  %v124 = vpack.c.bf16 %v108, %v108
  %v125 = vpack.c.bf16 %v109, %v109
  %v126 = vpack.c.bf16 %v110, %v110
  %v127 = vpack.c.bf16 %v111, %v111
  %v128 = vpack.c.bf16 %v112, %v112
  %v129 = vpack.c.bf16 %v113, %v113
  %v130 = vpack.c.bf16 %v114, %v114
  %v147 = vunpack.c.l.b16 %v83
  %v148 = vunpack.c.l.b16 %v84
  %v149 = vunpack.c.l.b16 %v85
  %v150 = vunpack.c.l.b16 %v86
  %v151 = vunpack.c.l.b16 %v87
  %v152 = vunpack.c.l.b16 %v88
  %v153 = vunpack.c.l.b16 %v89
  %v154 = vunpack.c.l.b16 %v90
  %v155 = vunpack.c.l.b16 %v91
  %v156 = vunpack.c.l.b16 %v92
  %v157 = vunpack.c.l.b16 %v93
  %v158 = vunpack.c.l.b16 %v94
  %v159 = vunpack.c.l.b16 %v95
  %v160 = vunpack.c.l.b16 %v96
  %v161 = vunpack.c.l.b16 %v97
  %v162 = vunpack.c.l.b16 %v98
  %v163 = vpack.c.b16 %v148, %v147
  %v164 = vpack.c.b16 %v150, %v149
  %v165 = vpack.c.b16 %v152, %v151
  %v166 = vpack.c.b16 %v154, %v153
  %v167 = vpack.c.b16 %v156, %v155
  %v168 = vpack.c.b16 %v158, %v157
  %v169 = vpack.c.b16 %v160, %v159
  %v170 = vpack.c.b16 %v162, %v161
  %v187 = vunpack.c.l.b16 %v115
  %v188 = vunpack.c.l.b16 %v116
  %v189 = vunpack.c.l.b16 %v117
  %v190 = vunpack.c.l.b16 %v118
  %v191 = vunpack.c.l.b16 %v119
  %v192 = vunpack.c.l.b16 %v120
  %v193 = vunpack.c.l.b16 %v121
  %v194 = vunpack.c.l.b16 %v122
  %v195 = vunpack.c.l.b16 %v123
  %v196 = vunpack.c.l.b16 %v124
  %v197 = vunpack.c.l.b16 %v125
  %v198 = vunpack.c.l.b16 %v126
  %v199 = vunpack.c.l.b16 %v127
  %v200 = vunpack.c.l.b16 %v128
  %v201 = vunpack.c.l.b16 %v129
  %v202 = vunpack.c.l.b16 %v130
  %v203 = vpack.c.b16 %v188, %v187
  %v204 = vpack.c.b16 %v190, %v189
  %v205 = vpack.c.b16 %v192, %v191
  %v206 = vpack.c.b16 %v194, %v193
  %v207 = vpack.c.b16 %v196, %v195
  %v208 = vpack.c.b16 %v198, %v197
  %v209 = vpack.c.b16 %v200, %v199
  %v210 = vpack.c.b16 %v202, %v201
  %211 = vrot.lane.b32.xlu0 %v203, 64
  %v212 = vpop.permute.xlu0 %211
  %213 = vrot.lane.b32.xlu0 %v204, 64
  %v214 = vpop.permute.xlu0 %213
  %215 = vrot.lane.b32.xlu0 %v205, 64
  %v216 = vpop.permute.xlu0 %215
  %217 = vrot.lane.b32.xlu0 %v206, 64
  %v218 = vpop.permute.xlu0 %217
  %219 = vrot.lane.b32.xlu0 %v207, 64
  %v220 = vpop.permute.xlu0 %219
  %221 = vrot.lane.b32.xlu0 %v208, 64
  %v222 = vpop.permute.xlu0 %221
  %223 = vrot.lane.b32.xlu0 %v209, 64
  %v224 = vpop.permute.xlu0 %223
  %225 = vrot.lane.b32.xlu0 %v210, 64
  %v226 = vpop.permute.xlu0 %225
  %vm227 = vcmask 523264
  %v230 = vsel %vm227, %v163, %v212
  %v234 = vsel %vm227, %v164, %v214
  %v238 = vsel %vm227, %v165, %v216
  %v242 = vsel %vm227, %v166, %v218
  %v246 = vsel %vm227, %v167, %v220
  %v250 = vsel %vm227, %v168, %v222
  %v254 = vsel %vm227, %v169, %v224
  %v258 = vsel %vm227, %v170, %v226
  %v260 = vperm.slane %v59, 0
  %v277 = vunpack.c.l.b16 %v27
  %v278 = vunpack.c.l.b16 %v28
  %v279 = vunpack.c.l.b16 %v29
  %v280 = vunpack.c.l.b16 %v30
  %v281 = vunpack.c.l.b16 %v31
  %v282 = vunpack.c.l.b16 %v32
  %v283 = vunpack.c.l.b16 %v33
  %v284 = vunpack.c.l.b16 %v34
  %v285 = vunpack.c.l.b16 %v35
  %v286 = vunpack.c.l.b16 %v36
  %v287 = vunpack.c.l.b16 %v37
  %v288 = vunpack.c.l.b16 %v38
  %v289 = vunpack.c.l.b16 %v39
  %v290 = vunpack.c.l.b16 %v40
  %v291 = vunpack.c.l.b16 %v41
  %v292 = vunpack.c.l.b16 %v42
  %v293 = vpack.c.b16 %v278, %v277
  %v294 = vpack.c.b16 %v280, %v279
  %v295 = vpack.c.b16 %v282, %v281
  %v296 = vpack.c.b16 %v284, %v283
  %v297 = vpack.c.b16 %v286, %v285
  %v298 = vpack.c.b16 %v288, %v287
  %v299 = vpack.c.b16 %v290, %v289
  %v300 = vpack.c.b16 %v292, %v291
  %309 = vmatpush.bf16.msra.mxu0 %v300
  %310 = vmatpush.bf16.msra.mxu0 %v299
  %311 = vmatpush.bf16.msra.mxu0 %v298
  %312 = vmatpush.bf16.msra.mxu0 %v297
  %313 = vmatpush.bf16.msra.mxu0 %v296
  %314 = vmatpush.bf16.msra.mxu0 %v295
  %315 = vmatpush.bf16.msra.mxu0 %v294
  %316 = vmatpush.bf16.msra.mxu0 %v293
  %317 = vmatmul.bf16.gmra.mxu0 %v230
  %v318 = vpop.f32.mrf.mxu0
  %v319 = vadd.f32 %v260, %v318
  %v320 = vpop.f32.mrf.mxu0
  %v321 = vadd.f32 %v260, %v320
  %322 = vmatmul.bf16.gmra.mxu0 %v234
  %v323 = vpop.f32.mrf.mxu0
  %v324 = vadd.f32 %v260, %v323
  %v325 = vpop.f32.mrf.mxu0
  %v326 = vadd.f32 %v260, %v325
  %327 = vmatmul.bf16.gmra.mxu0 %v238
  %v328 = vpop.f32.mrf.mxu0
  %v329 = vadd.f32 %v260, %v328
  %v330 = vpop.f32.mrf.mxu0
  %v331 = vadd.f32 %v260, %v330
  %332 = vmatmul.bf16.gmra.mxu0 %v242
  %v333 = vpop.f32.mrf.mxu0
  %v334 = vadd.f32 %v260, %v333
  %v335 = vpop.f32.mrf.mxu0
  %v336 = vadd.f32 %v260, %v335
  %337 = vmatmul.bf16.gmra.mxu0 %v246
  %v338 = vpop.f32.mrf.mxu0
  %v339 = vadd.f32 %v260, %v338
  %v340 = vpop.f32.mrf.mxu0
  %v341 = vadd.f32 %v260, %v340
  %342 = vmatmul.bf16.gmra.mxu0 %v250
  %v343 = vpop.f32.mrf.mxu0
  %v344 = vadd.f32 %v260, %v343
  %v345 = vpop.f32.mrf.mxu0
  %v346 = vadd.f32 %v260, %v345
  %347 = vmatmul.bf16.gmra.mxu0 %v254
  %v348 = vpop.f32.mrf.mxu0
  %v349 = vadd.f32 %v260, %v348
  %v350 = vpop.f32.mrf.mxu0
  %v351 = vadd.f32 %v260, %v350
  %352 = vmatmul.bf16.gmra.mxu0 %v258
  %v353 = vpop.f32.mrf.mxu0
  %v354 = vadd.f32 %v260, %v353
  %v355 = vpop.f32.mrf.mxu0
  %v356 = vadd.f32 %v260, %v355
  %357 = vdwg.mxu0
  %358 = vadd.xlane.f32.xlu0 %v319
  %v359 = vpop.xlane.xlu0 %358
  %360 = vadd.xlane.f32.xlu0 %v321
  %v361 = vpop.xlane.xlu0 %360
  %362 = vadd.xlane.f32.xlu0 %v324
  %v363 = vpop.xlane.xlu0 %362
  %364 = vadd.xlane.f32.xlu0 %v326
  %v365 = vpop.xlane.xlu0 %364
  %366 = vadd.xlane.f32.xlu0 %v329
  %v367 = vpop.xlane.xlu0 %366
  %368 = vadd.xlane.f32.xlu0 %v331
  %v369 = vpop.xlane.xlu0 %368
  %370 = vadd.xlane.f32.xlu0 %v334
  %v371 = vpop.xlane.xlu0 %370
  %372 = vadd.xlane.f32.xlu0 %v336
  %v373 = vpop.xlane.xlu0 %372
  %374 = vadd.xlane.f32.xlu0 %v339
  %v375 = vpop.xlane.xlu0 %374
  %376 = vadd.xlane.f32.xlu0 %v341
  %v377 = vpop.xlane.xlu0 %376
  %378 = vadd.xlane.f32.xlu0 %v344
  %v379 = vpop.xlane.xlu0 %378
  %380 = vadd.xlane.f32.xlu0 %v346
  %v381 = vpop.xlane.xlu0 %380
  %382 = vadd.xlane.f32.xlu0 %v349
  %v383 = vpop.xlane.xlu0 %382
  %384 = vadd.xlane.f32.xlu0 %v351
  %v385 = vpop.xlane.xlu0 %384
  %386 = vadd.xlane.f32.xlu0 %v354
  %v387 = vpop.xlane.xlu0 %386
  %388 = vadd.xlane.f32.xlu0 %v356
  %v389 = vpop.xlane.xlu0 %388
  %v390 = vmul.f32 %v319, %v319
  %v391 = vmul.f32 %v321, %v321
  %v392 = vmul.f32 %v324, %v324
  %v393 = vmul.f32 %v326, %v326
  %v394 = vmul.f32 %v329, %v329
  %v395 = vmul.f32 %v331, %v331
  %v396 = vmul.f32 %v334, %v334
  %v397 = vmul.f32 %v336, %v336
  %v398 = vmul.f32 %v339, %v339
  %v399 = vmul.f32 %v341, %v341
  %v400 = vmul.f32 %v344, %v344
  %v401 = vmul.f32 %v346, %v346
  %v402 = vmul.f32 %v349, %v349
  %v403 = vmul.f32 %v351, %v351
  %v404 = vmul.f32 %v354, %v354
  %v405 = vmul.f32 %v356, %v356
  %406 = vadd.xlane.f32.xlu0 %v390
  %v407 = vpop.xlane.xlu0 %406
  %408 = vadd.xlane.f32.xlu0 %v391
  %v409 = vpop.xlane.xlu0 %408
  %410 = vadd.xlane.f32.xlu0 %v392
  %v411 = vpop.xlane.xlu0 %410
  %412 = vadd.xlane.f32.xlu0 %v393
  %v413 = vpop.xlane.xlu0 %412
  %414 = vadd.xlane.f32.xlu0 %v394
  %v415 = vpop.xlane.xlu0 %414
  %416 = vadd.xlane.f32.xlu0 %v395
  %v417 = vpop.xlane.xlu0 %416
  %418 = vadd.xlane.f32.xlu0 %v396
  %v419 = vpop.xlane.xlu0 %418
  %420 = vadd.xlane.f32.xlu0 %v397
  %v421 = vpop.xlane.xlu0 %420
  %422 = vadd.xlane.f32.xlu0 %v398
  %v423 = vpop.xlane.xlu0 %422
  %424 = vadd.xlane.f32.xlu0 %v399
  %v425 = vpop.xlane.xlu0 %424
  %426 = vadd.xlane.f32.xlu0 %v400
  %v427 = vpop.xlane.xlu0 %426
  %428 = vadd.xlane.f32.xlu0 %v401
  %v429 = vpop.xlane.xlu0 %428
  %430 = vadd.xlane.f32.xlu0 %v402
  %v431 = vpop.xlane.xlu0 %430
  %432 = vadd.xlane.f32.xlu0 %v403
  %v433 = vpop.xlane.xlu0 %432
  %434 = vadd.xlane.f32.xlu0 %v404
  %v435 = vpop.xlane.xlu0 %434
  %436 = vadd.xlane.f32.xlu0 %v405
  %v437 = vpop.xlane.xlu0 %436
  %v438 = vmul.f32 %v359, 0.0078125
  %v439 = vmul.f32 %v361, 0.0078125
  %v440 = vmul.f32 %v363, 0.0078125
  %v441 = vmul.f32 %v365, 0.0078125
  %v442 = vmul.f32 %v367, 0.0078125
  %v443 = vmul.f32 %v369, 0.0078125
  %v444 = vmul.f32 %v371, 0.0078125
  %v445 = vmul.f32 %v373, 0.0078125
  %v446 = vmul.f32 %v375, 0.0078125
  %v447 = vmul.f32 %v377, 0.0078125
  %v448 = vmul.f32 %v379, 0.0078125
  %v449 = vmul.f32 %v381, 0.0078125
  %v450 = vmul.f32 %v383, 0.0078125
  %v451 = vmul.f32 %v385, 0.0078125
  %v452 = vmul.f32 %v387, 0.0078125
  %v453 = vmul.f32 %v389, 0.0078125
  %v454 = vmul.f32 %v407, 0.0078125
  %v455 = vmul.f32 %v409, 0.0078125
  %v456 = vmul.f32 %v411, 0.0078125
  %v457 = vmul.f32 %v413, 0.0078125
  %v458 = vmul.f32 %v415, 0.0078125
  %v459 = vmul.f32 %v417, 0.0078125
  %v460 = vmul.f32 %v419, 0.0078125
  %v461 = vmul.f32 %v421, 0.0078125
  %v462 = vmul.f32 %v423, 0.0078125
  %v463 = vmul.f32 %v425, 0.0078125
  %v464 = vmul.f32 %v427, 0.0078125
  %v465 = vmul.f32 %v429, 0.0078125
  %v466 = vmul.f32 %v431, 0.0078125
  %v467 = vmul.f32 %v433, 0.0078125
  %v468 = vmul.f32 %v435, 0.0078125
  %v469 = vmul.f32 %v437, 0.0078125
  %v470 = vmul.f32 %v438, %v438
  %v471 = vmul.f32 %v439, %v439
  %v472 = vmul.f32 %v440, %v440
  %v473 = vmul.f32 %v441, %v441
  %v474 = vmul.f32 %v442, %v442
  %v475 = vmul.f32 %v443, %v443
  %v476 = vmul.f32 %v444, %v444
  %v477 = vmul.f32 %v445, %v445
  %v478 = vmul.f32 %v446, %v446
  %v479 = vmul.f32 %v447, %v447
  %v480 = vmul.f32 %v448, %v448
  %v481 = vmul.f32 %v449, %v449
  %v482 = vmul.f32 %v450, %v450
  %v483 = vmul.f32 %v451, %v451
  %v484 = vmul.f32 %v452, %v452
  %v485 = vmul.f32 %v453, %v453
  %v486 = vsub.f32 %v454, %v470
  %v487 = vsub.f32 %v455, %v471
  %v488 = vsub.f32 %v456, %v472
  %v489 = vsub.f32 %v457, %v473
  %v490 = vsub.f32 %v458, %v474
  %v491 = vsub.f32 %v459, %v475
  %v492 = vsub.f32 %v460, %v476
  %v493 = vsub.f32 %v461, %v477
  %v494 = vsub.f32 %v462, %v478
  %v495 = vsub.f32 %v463, %v479
  %v496 = vsub.f32 %v464, %v480
  %v497 = vsub.f32 %v465, %v481
  %v498 = vsub.f32 %v466, %v482
  %v499 = vsub.f32 %v467, %v483
  %v500 = vsub.f32 %v468, %v484
  %v501 = vsub.f32 %v469, %v485
  %v502 = vmax.f32 %v486, 0.0
  %v503 = vmax.f32 %v487, 0.0
  %v504 = vmax.f32 %v488, 0.0
  %v505 = vmax.f32 %v489, 0.0
  %v506 = vmax.f32 %v490, 0.0
  %v507 = vmax.f32 %v491, 0.0
  %v508 = vmax.f32 %v492, 0.0
  %v509 = vmax.f32 %v493, 0.0
  %v510 = vmax.f32 %v494, 0.0
  %v511 = vmax.f32 %v495, 0.0
  %v512 = vmax.f32 %v496, 0.0
  %v513 = vmax.f32 %v497, 0.0
  %v514 = vmax.f32 %v498, 0.0
  %v515 = vmax.f32 %v499, 0.0
  %v516 = vmax.f32 %v500, 0.0
  %v517 = vmax.f32 %v501, 0.0
  %v518 = vsub.f32 %v319, %v438
  %v519 = vsub.f32 %v321, %v439
  %v520 = vsub.f32 %v324, %v440
  %v521 = vsub.f32 %v326, %v441
  %v522 = vsub.f32 %v329, %v442
  %v523 = vsub.f32 %v331, %v443
  %v524 = vsub.f32 %v334, %v444
  %v525 = vsub.f32 %v336, %v445
  %v526 = vsub.f32 %v339, %v446
  %v527 = vsub.f32 %v341, %v447
  %v528 = vsub.f32 %v344, %v448
  %v529 = vsub.f32 %v346, %v449
  %v530 = vsub.f32 %v349, %v450
  %v531 = vsub.f32 %v351, %v451
  %v532 = vsub.f32 %v354, %v452
  %v533 = vsub.f32 %v356, %v453
  %v534 = vadd.f32 %v502, 1e-05
  %v535 = vadd.f32 %v503, 1e-05
  %v536 = vadd.f32 %v504, 1e-05
  %v537 = vadd.f32 %v505, 1e-05
  %v538 = vadd.f32 %v506, 1e-05
  %v539 = vadd.f32 %v507, 1e-05
  %v540 = vadd.f32 %v508, 1e-05
  %v541 = vadd.f32 %v509, 1e-05
  %v542 = vadd.f32 %v510, 1e-05
  %v543 = vadd.f32 %v511, 1e-05
  %v544 = vadd.f32 %v512, 1e-05
  %v545 = vadd.f32 %v513, 1e-05
  %v546 = vadd.f32 %v514, 1e-05
  %v547 = vadd.f32 %v515, 1e-05
  %v548 = vadd.f32 %v516, 1e-05
  %v549 = vadd.f32 %v517, 1e-05
  %v550 = vrsqrt.pop %v534
  %v551 = vmul.f32 %v550, %v534
  %v552 = vmul.f32 %v551, %v550
  %v553 = vmul.f32 0.5, %v552
  %v554 = vsub.f32 1.5, %v553
  %v555 = vmul.f32 %v550, %v554
  %vm556 = vweird.f32 %v534
  %vm557 = vweird.f32 %v550
  %vm558 = vmor %vm556, %vm557
  %v559 = vsel %vm558, %v550, %v555
  %v560 = vrsqrt.pop %v535
  %v561 = vmul.f32 %v560, %v535
  %v562 = vmul.f32 %v561, %v560
  %v563 = vmul.f32 0.5, %v562
  %v564 = vsub.f32 1.5, %v563
  %v565 = vmul.f32 %v560, %v564
  %vm566 = vweird.f32 %v535
  %vm567 = vweird.f32 %v560
  %vm568 = vmor %vm566, %vm567
  %v569 = vsel %vm568, %v560, %v565
  %v570 = vrsqrt.pop %v536
  %v571 = vmul.f32 %v570, %v536
  %v572 = vmul.f32 %v571, %v570
  %v573 = vmul.f32 0.5, %v572
  %v574 = vsub.f32 1.5, %v573
  %v575 = vmul.f32 %v570, %v574
  %vm576 = vweird.f32 %v536
  %vm577 = vweird.f32 %v570
  %vm578 = vmor %vm576, %vm577
  %v579 = vsel %vm578, %v570, %v575
  %v580 = vrsqrt.pop %v537
  %v581 = vmul.f32 %v580, %v537
  %v582 = vmul.f32 %v581, %v580
  %v583 = vmul.f32 0.5, %v582
  %v584 = vsub.f32 1.5, %v583
  %v585 = vmul.f32 %v580, %v584
  %vm586 = vweird.f32 %v537
  %vm587 = vweird.f32 %v580
  %vm588 = vmor %vm586, %vm587
  %v589 = vsel %vm588, %v580, %v585
  %v590 = vrsqrt.pop %v538
  %v591 = vmul.f32 %v590, %v538
  %v592 = vmul.f32 %v591, %v590
  %v593 = vmul.f32 0.5, %v592
  %v594 = vsub.f32 1.5, %v593
  %v595 = vmul.f32 %v590, %v594
  %vm596 = vweird.f32 %v538
  %vm597 = vweird.f32 %v590
  %vm598 = vmor %vm596, %vm597
  %v599 = vsel %vm598, %v590, %v595
  %v600 = vrsqrt.pop %v539
  %v601 = vmul.f32 %v600, %v539
  %v602 = vmul.f32 %v601, %v600
  %v603 = vmul.f32 0.5, %v602
  %v604 = vsub.f32 1.5, %v603
  %v605 = vmul.f32 %v600, %v604
  %vm606 = vweird.f32 %v539
  %vm607 = vweird.f32 %v600
  %vm608 = vmor %vm606, %vm607
  %v609 = vsel %vm608, %v600, %v605
  %v610 = vrsqrt.pop %v540
  %v611 = vmul.f32 %v610, %v540
  %v612 = vmul.f32 %v611, %v610
  %v613 = vmul.f32 0.5, %v612
  %v614 = vsub.f32 1.5, %v613
  %v615 = vmul.f32 %v610, %v614
  %vm616 = vweird.f32 %v540
  %vm617 = vweird.f32 %v610
  %vm618 = vmor %vm616, %vm617
  %v619 = vsel %vm618, %v610, %v615
  %v620 = vrsqrt.pop %v541
  %v621 = vmul.f32 %v620, %v541
  %v622 = vmul.f32 %v621, %v620
  %v623 = vmul.f32 0.5, %v622
  %v624 = vsub.f32 1.5, %v623
  %v625 = vmul.f32 %v620, %v624
  %vm626 = vweird.f32 %v541
  %vm627 = vweird.f32 %v620
  %vm628 = vmor %vm626, %vm627
  %v629 = vsel %vm628, %v620, %v625
  %v630 = vrsqrt.pop %v542
  %v631 = vmul.f32 %v630, %v542
  %v632 = vmul.f32 %v631, %v630
  %v633 = vmul.f32 0.5, %v632
  %v634 = vsub.f32 1.5, %v633
  %v635 = vmul.f32 %v630, %v634
  %vm636 = vweird.f32 %v542
  %vm637 = vweird.f32 %v630
  %vm638 = vmor %vm636, %vm637
  %v639 = vsel %vm638, %v630, %v635
  %v640 = vrsqrt.pop %v543
  %v641 = vmul.f32 %v640, %v543
  %v642 = vmul.f32 %v641, %v640
  %v643 = vmul.f32 0.5, %v642
  %v644 = vsub.f32 1.5, %v643
  %v645 = vmul.f32 %v640, %v644
  %vm646 = vweird.f32 %v543
  %vm647 = vweird.f32 %v640
  %vm648 = vmor %vm646, %vm647
  %v649 = vsel %vm648, %v640, %v645
  %v650 = vrsqrt.pop %v544
  %v651 = vmul.f32 %v650, %v544
  %v652 = vmul.f32 %v651, %v650
  %v653 = vmul.f32 0.5, %v652
  %v654 = vsub.f32 1.5, %v653
  %v655 = vmul.f32 %v650, %v654
  %vm656 = vweird.f32 %v544
  %vm657 = vweird.f32 %v650
  %vm658 = vmor %vm656, %vm657
  %v659 = vsel %vm658, %v650, %v655
  %v660 = vrsqrt.pop %v545
  %v661 = vmul.f32 %v660, %v545
  %v662 = vmul.f32 %v661, %v660
  %v663 = vmul.f32 0.5, %v662
  %v664 = vsub.f32 1.5, %v663
  %v665 = vmul.f32 %v660, %v664
  %vm666 = vweird.f32 %v545
  %vm667 = vweird.f32 %v660
  %vm668 = vmor %vm666, %vm667
  %v669 = vsel %vm668, %v660, %v665
  %v670 = vrsqrt.pop %v546
  %v671 = vmul.f32 %v670, %v546
  %v672 = vmul.f32 %v671, %v670
  %v673 = vmul.f32 0.5, %v672
  %v674 = vsub.f32 1.5, %v673
  %v675 = vmul.f32 %v670, %v674
  %vm676 = vweird.f32 %v546
  %vm677 = vweird.f32 %v670
  %vm678 = vmor %vm676, %vm677
  %v679 = vsel %vm678, %v670, %v675
  %v680 = vrsqrt.pop %v547
  %v681 = vmul.f32 %v680, %v547
  %v682 = vmul.f32 %v681, %v680
  %v683 = vmul.f32 0.5, %v682
  %v684 = vsub.f32 1.5, %v683
  %v685 = vmul.f32 %v680, %v684
  %vm686 = vweird.f32 %v547
  %vm687 = vweird.f32 %v680
  %vm688 = vmor %vm686, %vm687
  %v689 = vsel %vm688, %v680, %v685
  %v690 = vrsqrt.pop %v548
  %v691 = vmul.f32 %v690, %v548
  %v692 = vmul.f32 %v691, %v690
  %v693 = vmul.f32 0.5, %v692
  %v694 = vsub.f32 1.5, %v693
  %v695 = vmul.f32 %v690, %v694
  %vm696 = vweird.f32 %v548
  %vm697 = vweird.f32 %v690
  %vm698 = vmor %vm696, %vm697
  %v699 = vsel %vm698, %v690, %v695
  %v700 = vrsqrt.pop %v549
  %v701 = vmul.f32 %v700, %v549
  %v702 = vmul.f32 %v701, %v700
  %v703 = vmul.f32 0.5, %v702
  %v704 = vsub.f32 1.5, %v703
  %v705 = vmul.f32 %v700, %v704
  %vm706 = vweird.f32 %v549
  %vm707 = vweird.f32 %v700
  %vm708 = vmor %vm706, %vm707
  %v709 = vsel %vm708, %v700, %v705
  %v710 = vmul.f32 %v518, %v559
  %v711 = vmul.f32 %v519, %v569
  %v712 = vmul.f32 %v520, %v579
  %v713 = vmul.f32 %v521, %v589
  %v714 = vmul.f32 %v522, %v599
  %v715 = vmul.f32 %v523, %v609
  %v716 = vmul.f32 %v524, %v619
  %v717 = vmul.f32 %v525, %v629
  %v718 = vmul.f32 %v526, %v639
  %v719 = vmul.f32 %v527, %v649
  %v720 = vmul.f32 %v528, %v659
  %v721 = vmul.f32 %v529, %v669
  %v722 = vmul.f32 %v530, %v679
  %v723 = vmul.f32 %v531, %v689
  %v724 = vmul.f32 %v532, %v699
  %v725 = vmul.f32 %v533, %v709
  %v726 = vperm.slane %v60, 0
  %v727 = vmul.f32 %v710, %v726
  %v728 = vmul.f32 %v711, %v726
  %v729 = vmul.f32 %v712, %v726
  %v730 = vmul.f32 %v713, %v726
  %v731 = vmul.f32 %v714, %v726
  %v732 = vmul.f32 %v715, %v726
  %v733 = vmul.f32 %v716, %v726
  %v734 = vmul.f32 %v717, %v726
  %v735 = vmul.f32 %v718, %v726
  %v736 = vmul.f32 %v719, %v726
  %v737 = vmul.f32 %v720, %v726
  %v738 = vmul.f32 %v721, %v726
  %v739 = vmul.f32 %v722, %v726
  %v740 = vmul.f32 %v723, %v726
  %v741 = vmul.f32 %v724, %v726
  %v742 = vmul.f32 %v725, %v726
  %v743 = vperm.slane %v61, 0
  %v744 = vadd.f32 %v727, %v743
  %v745 = vadd.f32 %v728, %v743
  %v746 = vadd.f32 %v729, %v743
  %v747 = vadd.f32 %v730, %v743
  %v748 = vadd.f32 %v731, %v743
  %v749 = vadd.f32 %v732, %v743
  %v750 = vadd.f32 %v733, %v743
  %v751 = vadd.f32 %v734, %v743
  %v752 = vadd.f32 %v735, %v743
  %v753 = vadd.f32 %v736, %v743
  %v754 = vadd.f32 %v737, %v743
  %v755 = vadd.f32 %v738, %v743
  %v756 = vadd.f32 %v739, %v743
  %v757 = vadd.f32 %v740, %v743
  %v758 = vadd.f32 %v741, %v743
  %v759 = vadd.f32 %v742, %v743
  %v760 = vmax.f32 %v744, 0.0
  %v761 = vmax.f32 %v745, 0.0
  %v762 = vmax.f32 %v746, 0.0
  %v763 = vmax.f32 %v747, 0.0
  %v764 = vmax.f32 %v748, 0.0
  %v765 = vmax.f32 %v749, 0.0
  %v766 = vmax.f32 %v750, 0.0
  %v767 = vmax.f32 %v751, 0.0
  %v768 = vmax.f32 %v752, 0.0
  %v769 = vmax.f32 %v753, 0.0
  %v770 = vmax.f32 %v754, 0.0
  %v771 = vmax.f32 %v755, 0.0
  %v772 = vmax.f32 %v756, 0.0
  %v773 = vmax.f32 %v757, 0.0
  %v774 = vmax.f32 %v758, 0.0
  %v775 = vmax.f32 %v759, 0.0
  %v776 = vpack.c.bf16 %v761, %v760
  %v777 = vpack.c.bf16 %v763, %v762
  %v778 = vpack.c.bf16 %v765, %v764
  %v779 = vpack.c.bf16 %v767, %v766
  %v780 = vpack.c.bf16 %v769, %v768
  %v781 = vpack.c.bf16 %v771, %v770
  %v782 = vpack.c.bf16 %v773, %v772
  %v783 = vpack.c.bf16 %v775, %v774
  %v784 = vperm.slane %v62, 0
  %v801 = vunpack.c.l.b16 %v43
  %v802 = vunpack.c.l.b16 %v44
  %v803 = vunpack.c.l.b16 %v45
  %v804 = vunpack.c.l.b16 %v46
  %v805 = vunpack.c.l.b16 %v47
  %v806 = vunpack.c.l.b16 %v48
  %v807 = vunpack.c.l.b16 %v49
  %v808 = vunpack.c.l.b16 %v50
  %v809 = vunpack.c.l.b16 %v51
  %v810 = vunpack.c.l.b16 %v52
  %v811 = vunpack.c.l.b16 %v53
  %v812 = vunpack.c.l.b16 %v54
  %v813 = vunpack.c.l.b16 %v55
  %v814 = vunpack.c.l.b16 %v56
  %v815 = vunpack.c.l.b16 %v57
  %v816 = vunpack.c.l.b16 %v58
  %v817 = vpack.c.b16 %v802, %v801
  %v818 = vpack.c.b16 %v804, %v803
  %v819 = vpack.c.b16 %v806, %v805
  %v820 = vpack.c.b16 %v808, %v807
  %v821 = vpack.c.b16 %v810, %v809
  %v822 = vpack.c.b16 %v812, %v811
  %v823 = vpack.c.b16 %v814, %v813
  %v824 = vpack.c.b16 %v816, %v815
  %833 = vmatpush.bf16.msra.mxu0 %v824
  %834 = vmatpush.bf16.msra.mxu0 %v823
  %835 = vmatpush.bf16.msra.mxu0 %v822
  %836 = vmatpush.bf16.msra.mxu0 %v821
  %837 = vmatpush.bf16.msra.mxu0 %v820
  %838 = vmatpush.bf16.msra.mxu0 %v819
  %839 = vmatpush.bf16.msra.mxu0 %v818
  %840 = vmatpush.bf16.msra.mxu0 %v817
  %841 = vmatmul.bf16.gmra.mxu0 %v776
  %v842 = vpop.f32.mrf.mxu0
  %v843 = vadd.f32 %v784, %v842
  %v844 = vpop.f32.mrf.mxu0
  %v845 = vadd.f32 %v784, %v844
  %846 = vmatmul.bf16.gmra.mxu0 %v777
  %v847 = vpop.f32.mrf.mxu0
  %v848 = vadd.f32 %v784, %v847
  %v849 = vpop.f32.mrf.mxu0
  %v850 = vadd.f32 %v784, %v849
  %851 = vmatmul.bf16.gmra.mxu0 %v778
  %v852 = vpop.f32.mrf.mxu0
  %v853 = vadd.f32 %v784, %v852
  %v854 = vpop.f32.mrf.mxu0
  %v855 = vadd.f32 %v784, %v854
  %856 = vmatmul.bf16.gmra.mxu0 %v779
  %v857 = vpop.f32.mrf.mxu0
  %v858 = vadd.f32 %v784, %v857
  %v859 = vpop.f32.mrf.mxu0
  %v860 = vadd.f32 %v784, %v859
  %861 = vmatmul.bf16.gmra.mxu0 %v780
  %v862 = vpop.f32.mrf.mxu0
  %v863 = vadd.f32 %v784, %v862
  %v864 = vpop.f32.mrf.mxu0
  %v865 = vadd.f32 %v784, %v864
  %866 = vmatmul.bf16.gmra.mxu0 %v781
  %v867 = vpop.f32.mrf.mxu0
  %v868 = vadd.f32 %v784, %v867
  %v869 = vpop.f32.mrf.mxu0
  %v870 = vadd.f32 %v784, %v869
  %871 = vmatmul.bf16.gmra.mxu0 %v782
  %v872 = vpop.f32.mrf.mxu0
  %v873 = vadd.f32 %v784, %v872
  %v874 = vpop.f32.mrf.mxu0
  %v875 = vadd.f32 %v784, %v874
  %876 = vmatmul.bf16.gmra.mxu0 %v783
  %v877 = vpop.f32.mrf.mxu0
  %v878 = vadd.f32 %v784, %v877
  %v879 = vpop.f32.mrf.mxu0
  %v880 = vadd.f32 %v784, %v879
  %881 = vdwg.mxu0
  %v882 = vsel %vm227, %v843, 0.0
  %883 = vadd.xlane.f32.xlu0 %v882
  %v884 = vpop.xlane.xlu0 %883
  %v885 = vsel %vm227, %v845, 0.0
  %886 = vadd.xlane.f32.xlu0 %v885
  %v887 = vpop.xlane.xlu0 %886
  %v888 = vsel %vm227, %v848, 0.0
  %889 = vadd.xlane.f32.xlu0 %v888
  %v890 = vpop.xlane.xlu0 %889
  %v891 = vsel %vm227, %v850, 0.0
  %892 = vadd.xlane.f32.xlu0 %v891
  %v893 = vpop.xlane.xlu0 %892
  %v894 = vsel %vm227, %v853, 0.0
  %895 = vadd.xlane.f32.xlu0 %v894
  %v896 = vpop.xlane.xlu0 %895
  %v897 = vsel %vm227, %v855, 0.0
  %898 = vadd.xlane.f32.xlu0 %v897
  %v899 = vpop.xlane.xlu0 %898
  %v900 = vsel %vm227, %v858, 0.0
  %901 = vadd.xlane.f32.xlu0 %v900
  %v902 = vpop.xlane.xlu0 %901
  %v903 = vsel %vm227, %v860, 0.0
  %904 = vadd.xlane.f32.xlu0 %v903
  %v905 = vpop.xlane.xlu0 %904
  %v906 = vsel %vm227, %v863, 0.0
  %907 = vadd.xlane.f32.xlu0 %v906
  %v908 = vpop.xlane.xlu0 %907
  %v909 = vsel %vm227, %v865, 0.0
  %910 = vadd.xlane.f32.xlu0 %v909
  %v911 = vpop.xlane.xlu0 %910
  %v912 = vsel %vm227, %v868, 0.0
  %913 = vadd.xlane.f32.xlu0 %v912
  %v914 = vpop.xlane.xlu0 %913
  %v915 = vsel %vm227, %v870, 0.0
  %916 = vadd.xlane.f32.xlu0 %v915
  %v917 = vpop.xlane.xlu0 %916
  %v918 = vsel %vm227, %v873, 0.0
  %919 = vadd.xlane.f32.xlu0 %v918
  %v920 = vpop.xlane.xlu0 %919
  %v921 = vsel %vm227, %v875, 0.0
  %922 = vadd.xlane.f32.xlu0 %v921
  %v923 = vpop.xlane.xlu0 %922
  %v924 = vsel %vm227, %v878, 0.0
  %925 = vadd.xlane.f32.xlu0 %v924
  %v926 = vpop.xlane.xlu0 %925
  %v927 = vsel %vm227, %v880, 0.0
  %928 = vadd.xlane.f32.xlu0 %v927
  %v929 = vpop.xlane.xlu0 %928
  %v930 = vmul.f32 %v843, %v843
  %v931 = vmul.f32 %v845, %v845
  %v932 = vmul.f32 %v848, %v848
  %v933 = vmul.f32 %v850, %v850
  %v934 = vmul.f32 %v853, %v853
  %v935 = vmul.f32 %v855, %v855
  %v936 = vmul.f32 %v858, %v858
  %v937 = vmul.f32 %v860, %v860
  %v938 = vmul.f32 %v863, %v863
  %v939 = vmul.f32 %v865, %v865
  %v940 = vmul.f32 %v868, %v868
  %v941 = vmul.f32 %v870, %v870
  %v942 = vmul.f32 %v873, %v873
  %v943 = vmul.f32 %v875, %v875
  %v944 = vmul.f32 %v878, %v878
  %v945 = vmul.f32 %v880, %v880
  %v946 = vsel %vm227, %v930, 0.0
  %947 = vadd.xlane.f32.xlu0 %v946
  %v948 = vpop.xlane.xlu0 %947
  %v949 = vsel %vm227, %v931, 0.0
  %950 = vadd.xlane.f32.xlu0 %v949
  %v951 = vpop.xlane.xlu0 %950
  %v952 = vsel %vm227, %v932, 0.0
  %953 = vadd.xlane.f32.xlu0 %v952
  %v954 = vpop.xlane.xlu0 %953
  %v955 = vsel %vm227, %v933, 0.0
  %956 = vadd.xlane.f32.xlu0 %v955
  %v957 = vpop.xlane.xlu0 %956
  %v958 = vsel %vm227, %v934, 0.0
  %959 = vadd.xlane.f32.xlu0 %v958
  %v960 = vpop.xlane.xlu0 %959
  %v961 = vsel %vm227, %v935, 0.0
  %962 = vadd.xlane.f32.xlu0 %v961
  %v963 = vpop.xlane.xlu0 %962
  %v964 = vsel %vm227, %v936, 0.0
  %965 = vadd.xlane.f32.xlu0 %v964
  %v966 = vpop.xlane.xlu0 %965
  %v967 = vsel %vm227, %v937, 0.0
  %968 = vadd.xlane.f32.xlu0 %v967
  %v969 = vpop.xlane.xlu0 %968
  %v970 = vsel %vm227, %v938, 0.0
  %971 = vadd.xlane.f32.xlu0 %v970
  %v972 = vpop.xlane.xlu0 %971
  %v973 = vsel %vm227, %v939, 0.0
  %974 = vadd.xlane.f32.xlu0 %v973
  %v975 = vpop.xlane.xlu0 %974
  %v976 = vsel %vm227, %v940, 0.0
  %977 = vadd.xlane.f32.xlu0 %v976
  %v978 = vpop.xlane.xlu0 %977
  %v979 = vsel %vm227, %v941, 0.0
  %980 = vadd.xlane.f32.xlu0 %v979
  %v981 = vpop.xlane.xlu0 %980
  %v982 = vsel %vm227, %v942, 0.0
  %983 = vadd.xlane.f32.xlu0 %v982
  %v984 = vpop.xlane.xlu0 %983
  %v985 = vsel %vm227, %v943, 0.0
  %986 = vadd.xlane.f32.xlu0 %v985
  %v987 = vpop.xlane.xlu0 %986
  %v988 = vsel %vm227, %v944, 0.0
  %989 = vadd.xlane.f32.xlu0 %v988
  %v990 = vpop.xlane.xlu0 %989
  %v991 = vsel %vm227, %v945, 0.0
  %992 = vadd.xlane.f32.xlu0 %v991
  %v993 = vpop.xlane.xlu0 %992
  %v994 = vmul.f32 %v884, 0.015625
  %v995 = vmul.f32 %v887, 0.015625
  %v996 = vmul.f32 %v890, 0.015625
  %v997 = vmul.f32 %v893, 0.015625
  %v998 = vmul.f32 %v896, 0.015625
  %v999 = vmul.f32 %v899, 0.015625
  %v1000 = vmul.f32 %v902, 0.015625
  %v1001 = vmul.f32 %v905, 0.015625
  %v1002 = vmul.f32 %v908, 0.015625
  %v1003 = vmul.f32 %v911, 0.015625
  %v1004 = vmul.f32 %v914, 0.015625
  %v1005 = vmul.f32 %v917, 0.015625
  %v1006 = vmul.f32 %v920, 0.015625
  %v1007 = vmul.f32 %v923, 0.015625
  %v1008 = vmul.f32 %v926, 0.015625
  %v1009 = vmul.f32 %v929, 0.015625
  %v1010 = vmul.f32 %v948, 0.015625
  %v1011 = vmul.f32 %v951, 0.015625
  %v1012 = vmul.f32 %v954, 0.015625
  %v1013 = vmul.f32 %v957, 0.015625
  %v1014 = vmul.f32 %v960, 0.015625
  %v1015 = vmul.f32 %v963, 0.015625
  %v1016 = vmul.f32 %v966, 0.015625
  %v1017 = vmul.f32 %v969, 0.015625
  %v1018 = vmul.f32 %v972, 0.015625
  %v1019 = vmul.f32 %v975, 0.015625
  %v1020 = vmul.f32 %v978, 0.015625
  %v1021 = vmul.f32 %v981, 0.015625
  %v1022 = vmul.f32 %v984, 0.015625
  %v1023 = vmul.f32 %v987, 0.015625
  %v1024 = vmul.f32 %v990, 0.015625
  %v1025 = vmul.f32 %v993, 0.015625
  %v1026 = vmul.f32 %v994, %v994
  %v1027 = vmul.f32 %v995, %v995
  %v1028 = vmul.f32 %v996, %v996
  %v1029 = vmul.f32 %v997, %v997
  %v1030 = vmul.f32 %v998, %v998
  %v1031 = vmul.f32 %v999, %v999
  %v1032 = vmul.f32 %v1000, %v1000
  %v1033 = vmul.f32 %v1001, %v1001
  %v1034 = vmul.f32 %v1002, %v1002
  %v1035 = vmul.f32 %v1003, %v1003
  %v1036 = vmul.f32 %v1004, %v1004
  %v1037 = vmul.f32 %v1005, %v1005
  %v1038 = vmul.f32 %v1006, %v1006
  %v1039 = vmul.f32 %v1007, %v1007
  %v1040 = vmul.f32 %v1008, %v1008
  %v1041 = vmul.f32 %v1009, %v1009
  %v1042 = vsub.f32 %v1010, %v1026
  %v1043 = vsub.f32 %v1011, %v1027
  %v1044 = vsub.f32 %v1012, %v1028
  %v1045 = vsub.f32 %v1013, %v1029
  %v1046 = vsub.f32 %v1014, %v1030
  %v1047 = vsub.f32 %v1015, %v1031
  %v1048 = vsub.f32 %v1016, %v1032
  %v1049 = vsub.f32 %v1017, %v1033
  %v1050 = vsub.f32 %v1018, %v1034
  %v1051 = vsub.f32 %v1019, %v1035
  %v1052 = vsub.f32 %v1020, %v1036
  %v1053 = vsub.f32 %v1021, %v1037
  %v1054 = vsub.f32 %v1022, %v1038
  %v1055 = vsub.f32 %v1023, %v1039
  %v1056 = vsub.f32 %v1024, %v1040
  %v1057 = vsub.f32 %v1025, %v1041
  %v1058 = vmax.f32 %v1042, 0.0
  %v1059 = vmax.f32 %v1043, 0.0
  %v1060 = vmax.f32 %v1044, 0.0
  %v1061 = vmax.f32 %v1045, 0.0
  %v1062 = vmax.f32 %v1046, 0.0
  %v1063 = vmax.f32 %v1047, 0.0
  %v1064 = vmax.f32 %v1048, 0.0
  %v1065 = vmax.f32 %v1049, 0.0
  %v1066 = vmax.f32 %v1050, 0.0
  %v1067 = vmax.f32 %v1051, 0.0
  %v1068 = vmax.f32 %v1052, 0.0
  %v1069 = vmax.f32 %v1053, 0.0
  %v1070 = vmax.f32 %v1054, 0.0
  %v1071 = vmax.f32 %v1055, 0.0
  %v1072 = vmax.f32 %v1056, 0.0
  %v1073 = vmax.f32 %v1057, 0.0
  %v1074 = vsub.f32 %v843, %v994
  %v1075 = vsub.f32 %v845, %v995
  %v1076 = vsub.f32 %v848, %v996
  %v1077 = vsub.f32 %v850, %v997
  %v1078 = vsub.f32 %v853, %v998
  %v1079 = vsub.f32 %v855, %v999
  %v1080 = vsub.f32 %v858, %v1000
  %v1081 = vsub.f32 %v860, %v1001
  %v1082 = vsub.f32 %v863, %v1002
  %v1083 = vsub.f32 %v865, %v1003
  %v1084 = vsub.f32 %v868, %v1004
  %v1085 = vsub.f32 %v870, %v1005
  %v1086 = vsub.f32 %v873, %v1006
  %v1087 = vsub.f32 %v875, %v1007
  %v1088 = vsub.f32 %v878, %v1008
  %v1089 = vsub.f32 %v880, %v1009
  %v1090 = vadd.f32 %v1058, 1e-05
  %v1091 = vadd.f32 %v1059, 1e-05
  %v1092 = vadd.f32 %v1060, 1e-05
  %v1093 = vadd.f32 %v1061, 1e-05
  %v1094 = vadd.f32 %v1062, 1e-05
  %v1095 = vadd.f32 %v1063, 1e-05
  %v1096 = vadd.f32 %v1064, 1e-05
  %v1097 = vadd.f32 %v1065, 1e-05
  %v1098 = vadd.f32 %v1066, 1e-05
  %v1099 = vadd.f32 %v1067, 1e-05
  %v1100 = vadd.f32 %v1068, 1e-05
  %v1101 = vadd.f32 %v1069, 1e-05
  %v1102 = vadd.f32 %v1070, 1e-05
  %v1103 = vadd.f32 %v1071, 1e-05
  %v1104 = vadd.f32 %v1072, 1e-05
  %v1105 = vadd.f32 %v1073, 1e-05
  %v1106 = vrsqrt.pop %v1090
  %v1107 = vmul.f32 %v1106, %v1090
  %v1108 = vmul.f32 %v1107, %v1106
  %v1109 = vmul.f32 0.5, %v1108
  %v1110 = vsub.f32 1.5, %v1109
  %v1111 = vmul.f32 %v1106, %v1110
  %vm1112 = vweird.f32 %v1090
  %vm1113 = vweird.f32 %v1106
  %vm1114 = vmor %vm1112, %vm1113
  %v1115 = vsel %vm1114, %v1106, %v1111
  %v1116 = vrsqrt.pop %v1091
  %v1117 = vmul.f32 %v1116, %v1091
  %v1118 = vmul.f32 %v1117, %v1116
  %v1119 = vmul.f32 0.5, %v1118
  %v1120 = vsub.f32 1.5, %v1119
  %v1121 = vmul.f32 %v1116, %v1120
  %vm1122 = vweird.f32 %v1091
  %vm1123 = vweird.f32 %v1116
  %vm1124 = vmor %vm1122, %vm1123
  %v1125 = vsel %vm1124, %v1116, %v1121
  %v1126 = vrsqrt.pop %v1092
  %v1127 = vmul.f32 %v1126, %v1092
  %v1128 = vmul.f32 %v1127, %v1126
  %v1129 = vmul.f32 0.5, %v1128
  %v1130 = vsub.f32 1.5, %v1129
  %v1131 = vmul.f32 %v1126, %v1130
  %vm1132 = vweird.f32 %v1092
  %vm1133 = vweird.f32 %v1126
  %vm1134 = vmor %vm1132, %vm1133
  %v1135 = vsel %vm1134, %v1126, %v1131
  %v1136 = vrsqrt.pop %v1093
  %v1137 = vmul.f32 %v1136, %v1093
  %v1138 = vmul.f32 %v1137, %v1136
  %v1139 = vmul.f32 0.5, %v1138
  %v1140 = vsub.f32 1.5, %v1139
  %v1141 = vmul.f32 %v1136, %v1140
  %vm1142 = vweird.f32 %v1093
  %vm1143 = vweird.f32 %v1136
  %vm1144 = vmor %vm1142, %vm1143
  %v1145 = vsel %vm1144, %v1136, %v1141
  %v1146 = vrsqrt.pop %v1094
  %v1147 = vmul.f32 %v1146, %v1094
  %v1148 = vmul.f32 %v1147, %v1146
  %v1149 = vmul.f32 0.5, %v1148
  %v1150 = vsub.f32 1.5, %v1149
  %v1151 = vmul.f32 %v1146, %v1150
  %vm1152 = vweird.f32 %v1094
  %vm1153 = vweird.f32 %v1146
  %vm1154 = vmor %vm1152, %vm1153
  %v1155 = vsel %vm1154, %v1146, %v1151
  %v1156 = vrsqrt.pop %v1095
  %v1157 = vmul.f32 %v1156, %v1095
  %v1158 = vmul.f32 %v1157, %v1156
  %v1159 = vmul.f32 0.5, %v1158
  %v1160 = vsub.f32 1.5, %v1159
  %v1161 = vmul.f32 %v1156, %v1160
  %vm1162 = vweird.f32 %v1095
  %vm1163 = vweird.f32 %v1156
  %vm1164 = vmor %vm1162, %vm1163
  %v1165 = vsel %vm1164, %v1156, %v1161
  %v1166 = vrsqrt.pop %v1096
  %v1167 = vmul.f32 %v1166, %v1096
  %v1168 = vmul.f32 %v1167, %v1166
  %v1169 = vmul.f32 0.5, %v1168
  %v1170 = vsub.f32 1.5, %v1169
  %v1171 = vmul.f32 %v1166, %v1170
  %vm1172 = vweird.f32 %v1096
  %vm1173 = vweird.f32 %v1166
  %vm1174 = vmor %vm1172, %vm1173
  %v1175 = vsel %vm1174, %v1166, %v1171
  %v1176 = vrsqrt.pop %v1097
  %v1177 = vmul.f32 %v1176, %v1097
  %v1178 = vmul.f32 %v1177, %v1176
  %v1179 = vmul.f32 0.5, %v1178
  %v1180 = vsub.f32 1.5, %v1179
  %v1181 = vmul.f32 %v1176, %v1180
  %vm1182 = vweird.f32 %v1097
  %vm1183 = vweird.f32 %v1176
  %vm1184 = vmor %vm1182, %vm1183
  %v1185 = vsel %vm1184, %v1176, %v1181
  %v1186 = vrsqrt.pop %v1098
  %v1187 = vmul.f32 %v1186, %v1098
  %v1188 = vmul.f32 %v1187, %v1186
  %v1189 = vmul.f32 0.5, %v1188
  %v1190 = vsub.f32 1.5, %v1189
  %v1191 = vmul.f32 %v1186, %v1190
  %vm1192 = vweird.f32 %v1098
  %vm1193 = vweird.f32 %v1186
  %vm1194 = vmor %vm1192, %vm1193
  %v1195 = vsel %vm1194, %v1186, %v1191
  %v1196 = vrsqrt.pop %v1099
  %v1197 = vmul.f32 %v1196, %v1099
  %v1198 = vmul.f32 %v1197, %v1196
  %v1199 = vmul.f32 0.5, %v1198
  %v1200 = vsub.f32 1.5, %v1199
  %v1201 = vmul.f32 %v1196, %v1200
  %vm1202 = vweird.f32 %v1099
  %vm1203 = vweird.f32 %v1196
  %vm1204 = vmor %vm1202, %vm1203
  %v1205 = vsel %vm1204, %v1196, %v1201
  %v1206 = vrsqrt.pop %v1100
  %v1207 = vmul.f32 %v1206, %v1100
  %v1208 = vmul.f32 %v1207, %v1206
  %v1209 = vmul.f32 0.5, %v1208
  %v1210 = vsub.f32 1.5, %v1209
  %v1211 = vmul.f32 %v1206, %v1210
  %vm1212 = vweird.f32 %v1100
  %vm1213 = vweird.f32 %v1206
  %vm1214 = vmor %vm1212, %vm1213
  %v1215 = vsel %vm1214, %v1206, %v1211
  %v1216 = vrsqrt.pop %v1101
  %v1217 = vmul.f32 %v1216, %v1101
  %v1218 = vmul.f32 %v1217, %v1216
  %v1219 = vmul.f32 0.5, %v1218
  %v1220 = vsub.f32 1.5, %v1219
  %v1221 = vmul.f32 %v1216, %v1220
  %vm1222 = vweird.f32 %v1101
  %vm1223 = vweird.f32 %v1216
  %vm1224 = vmor %vm1222, %vm1223
  %v1225 = vsel %vm1224, %v1216, %v1221
  %v1226 = vrsqrt.pop %v1102
  %v1227 = vmul.f32 %v1226, %v1102
  %v1228 = vmul.f32 %v1227, %v1226
  %v1229 = vmul.f32 0.5, %v1228
  %v1230 = vsub.f32 1.5, %v1229
  %v1231 = vmul.f32 %v1226, %v1230
  %vm1232 = vweird.f32 %v1102
  %vm1233 = vweird.f32 %v1226
  %vm1234 = vmor %vm1232, %vm1233
  %v1235 = vsel %vm1234, %v1226, %v1231
  %v1236 = vrsqrt.pop %v1103
  %v1237 = vmul.f32 %v1236, %v1103
  %v1238 = vmul.f32 %v1237, %v1236
  %v1239 = vmul.f32 0.5, %v1238
  %v1240 = vsub.f32 1.5, %v1239
  %v1241 = vmul.f32 %v1236, %v1240
  %vm1242 = vweird.f32 %v1103
  %vm1243 = vweird.f32 %v1236
  %vm1244 = vmor %vm1242, %vm1243
  %v1245 = vsel %vm1244, %v1236, %v1241
  %v1246 = vrsqrt.pop %v1104
  %v1247 = vmul.f32 %v1246, %v1104
  %v1248 = vmul.f32 %v1247, %v1246
  %v1249 = vmul.f32 0.5, %v1248
  %v1250 = vsub.f32 1.5, %v1249
  %v1251 = vmul.f32 %v1246, %v1250
  %vm1252 = vweird.f32 %v1104
  %vm1253 = vweird.f32 %v1246
  %vm1254 = vmor %vm1252, %vm1253
  %v1255 = vsel %vm1254, %v1246, %v1251
  %v1256 = vrsqrt.pop %v1105
  %v1257 = vmul.f32 %v1256, %v1105
  %v1258 = vmul.f32 %v1257, %v1256
  %v1259 = vmul.f32 0.5, %v1258
  %v1260 = vsub.f32 1.5, %v1259
  %v1261 = vmul.f32 %v1256, %v1260
  %vm1262 = vweird.f32 %v1105
  %vm1263 = vweird.f32 %v1256
  %vm1264 = vmor %vm1262, %vm1263
  %v1265 = vsel %vm1264, %v1256, %v1261
  %v1266 = vmul.f32 %v1074, %v1115
  %v1267 = vmul.f32 %v1075, %v1125
  %v1268 = vmul.f32 %v1076, %v1135
  %v1269 = vmul.f32 %v1077, %v1145
  %v1270 = vmul.f32 %v1078, %v1155
  %v1271 = vmul.f32 %v1079, %v1165
  %v1272 = vmul.f32 %v1080, %v1175
  %v1273 = vmul.f32 %v1081, %v1185
  %v1274 = vmul.f32 %v1082, %v1195
  %v1275 = vmul.f32 %v1083, %v1205
  %v1276 = vmul.f32 %v1084, %v1215
  %v1277 = vmul.f32 %v1085, %v1225
  %v1278 = vmul.f32 %v1086, %v1235
  %v1279 = vmul.f32 %v1087, %v1245
  %v1280 = vmul.f32 %v1088, %v1255
  %v1281 = vmul.f32 %v1089, %v1265
  %v1282 = vperm.slane %v63, 0
  %v1283 = vmul.f32 %v1266, %v1282
  %v1284 = vmul.f32 %v1267, %v1282
  %v1285 = vmul.f32 %v1268, %v1282
  %v1286 = vmul.f32 %v1269, %v1282
  %v1287 = vmul.f32 %v1270, %v1282
  %v1288 = vmul.f32 %v1271, %v1282
  %v1289 = vmul.f32 %v1272, %v1282
  %v1290 = vmul.f32 %v1273, %v1282
  %v1291 = vmul.f32 %v1274, %v1282
  %v1292 = vmul.f32 %v1275, %v1282
  %v1293 = vmul.f32 %v1276, %v1282
  %v1294 = vmul.f32 %v1277, %v1282
  %v1295 = vmul.f32 %v1278, %v1282
  %v1296 = vmul.f32 %v1279, %v1282
  %v1297 = vmul.f32 %v1280, %v1282
  %v1298 = vmul.f32 %v1281, %v1282
  %v1299 = vperm.slane %v64, 0
  %v1300 = vadd.f32 %v1283, %v1299
  %v1301 = vadd.f32 %v1284, %v1299
  %v1302 = vadd.f32 %v1285, %v1299
  %v1303 = vadd.f32 %v1286, %v1299
  %v1304 = vadd.f32 %v1287, %v1299
  %v1305 = vadd.f32 %v1288, %v1299
  %v1306 = vadd.f32 %v1289, %v1299
  %v1307 = vadd.f32 %v1290, %v1299
  %v1308 = vadd.f32 %v1291, %v1299
  %v1309 = vadd.f32 %v1292, %v1299
  %v1310 = vadd.f32 %v1293, %v1299
  %v1311 = vadd.f32 %v1294, %v1299
  %v1312 = vadd.f32 %v1295, %v1299
  %v1313 = vadd.f32 %v1296, %v1299
  %v1314 = vadd.f32 %v1297, %v1299
  %v1315 = vadd.f32 %v1298, %v1299
  %v1316 = vmax.f32 %v1300, 0.0
  %v1317 = vmax.f32 %v1301, 0.0
  %v1318 = vmax.f32 %v1302, 0.0
  %v1319 = vmax.f32 %v1303, 0.0
  %v1320 = vmax.f32 %v1304, 0.0
  %v1321 = vmax.f32 %v1305, 0.0
  %v1322 = vmax.f32 %v1306, 0.0
  %v1323 = vmax.f32 %v1307, 0.0
  %v1324 = vmax.f32 %v1308, 0.0
  %v1325 = vmax.f32 %v1309, 0.0
  %v1326 = vmax.f32 %v1310, 0.0
  %v1327 = vmax.f32 %v1311, 0.0
  %v1328 = vmax.f32 %v1312, 0.0
  %v1329 = vmax.f32 %v1313, 0.0
  %v1330 = vmax.f32 %v1314, 0.0
  %v1331 = vmax.f32 %v1315, 0.0
  %v1332 = vperm.slane %v65, 0
  %v1333 = vmul.f32 %v1316, %v1332
  %v1334 = vmul.f32 %v1317, %v1332
  %v1335 = vmul.f32 %v1318, %v1332
  %v1336 = vmul.f32 %v1319, %v1332
  %v1337 = vmul.f32 %v1320, %v1332
  %v1338 = vmul.f32 %v1321, %v1332
  %v1339 = vmul.f32 %v1322, %v1332
  %v1340 = vmul.f32 %v1323, %v1332
  %v1341 = vmul.f32 %v1324, %v1332
  %v1342 = vmul.f32 %v1325, %v1332
  %v1343 = vmul.f32 %v1326, %v1332
  %v1344 = vmul.f32 %v1327, %v1332
  %v1345 = vmul.f32 %v1328, %v1332
  %v1346 = vmul.f32 %v1329, %v1332
  %v1347 = vmul.f32 %v1330, %v1332
  %v1348 = vmul.f32 %v1331, %v1332
  %v1349 = vsel %vm227, %v1333, 0.0
  %1350 = vadd.xlane.f32.xlu0 %v1349
  %v1351 = vpop.xlane.xlu0 %1350
  %v1352 = vsel %vm227, %v1334, 0.0
  %1353 = vadd.xlane.f32.xlu0 %v1352
  %v1354 = vpop.xlane.xlu0 %1353
  %v1355 = vsel %vm227, %v1335, 0.0
  %1356 = vadd.xlane.f32.xlu0 %v1355
  %v1357 = vpop.xlane.xlu0 %1356
  %v1358 = vsel %vm227, %v1336, 0.0
  %1359 = vadd.xlane.f32.xlu0 %v1358
  %v1360 = vpop.xlane.xlu0 %1359
  %v1361 = vsel %vm227, %v1337, 0.0
  %1362 = vadd.xlane.f32.xlu0 %v1361
  %v1363 = vpop.xlane.xlu0 %1362
  %v1364 = vsel %vm227, %v1338, 0.0
  %1365 = vadd.xlane.f32.xlu0 %v1364
  %v1366 = vpop.xlane.xlu0 %1365
  %v1367 = vsel %vm227, %v1339, 0.0
  %1368 = vadd.xlane.f32.xlu0 %v1367
  %v1369 = vpop.xlane.xlu0 %1368
  %v1370 = vsel %vm227, %v1340, 0.0
  %1371 = vadd.xlane.f32.xlu0 %v1370
  %v1372 = vpop.xlane.xlu0 %1371
  %v1373 = vsel %vm227, %v1341, 0.0
  %1374 = vadd.xlane.f32.xlu0 %v1373
  %v1375 = vpop.xlane.xlu0 %1374
  %v1376 = vsel %vm227, %v1342, 0.0
  %1377 = vadd.xlane.f32.xlu0 %v1376
  %v1378 = vpop.xlane.xlu0 %1377
  %v1379 = vsel %vm227, %v1343, 0.0
  %1380 = vadd.xlane.f32.xlu0 %v1379
  %v1381 = vpop.xlane.xlu0 %1380
  %v1382 = vsel %vm227, %v1344, 0.0
  %1383 = vadd.xlane.f32.xlu0 %v1382
  %v1384 = vpop.xlane.xlu0 %1383
  %v1385 = vsel %vm227, %v1345, 0.0
  %1386 = vadd.xlane.f32.xlu0 %v1385
  %v1387 = vpop.xlane.xlu0 %1386
  %v1388 = vsel %vm227, %v1346, 0.0
  %1389 = vadd.xlane.f32.xlu0 %v1388
  %v1390 = vpop.xlane.xlu0 %1389
  %v1391 = vsel %vm227, %v1347, 0.0
  %1392 = vadd.xlane.f32.xlu0 %v1391
  %v1393 = vpop.xlane.xlu0 %1392
  %v1394 = vsel %vm227, %v1348, 0.0
  %1395 = vadd.xlane.f32.xlu0 %v1394
  %v1396 = vpop.xlane.xlu0 %1395
  %v1397 = vstv %s66
  %v1398 = vadd.f32 %v1351, %v1397
  %v1399 = vadd.f32 %v1354, %v1397
  %v1400 = vadd.f32 %v1357, %v1397
  %v1401 = vadd.f32 %v1360, %v1397
  %v1402 = vadd.f32 %v1363, %v1397
  %v1403 = vadd.f32 %v1366, %v1397
  %v1404 = vadd.f32 %v1369, %v1397
  %v1405 = vadd.f32 %v1372, %v1397
  %v1406 = vadd.f32 %v1375, %v1397
  %v1407 = vadd.f32 %v1378, %v1397
  %v1408 = vadd.f32 %v1381, %v1397
  %v1409 = vadd.f32 %v1384, %v1397
  %v1410 = vadd.f32 %v1387, %v1397
  %v1411 = vadd.f32 %v1390, %v1397
  %v1412 = vadd.f32 %v1393, %v1397
  %v1413 = vadd.f32 %v1396, %v1397
  %v1414 = vxor.u32 %v1398, 2147483648
  %v1415 = vxor.u32 %v1399, 2147483648
  %v1416 = vxor.u32 %v1400, 2147483648
  %v1417 = vxor.u32 %v1401, 2147483648
  %v1418 = vxor.u32 %v1402, 2147483648
  %v1419 = vxor.u32 %v1403, 2147483648
  %v1420 = vxor.u32 %v1404, 2147483648
  %v1421 = vxor.u32 %v1405, 2147483648
  %v1422 = vxor.u32 %v1406, 2147483648
  %v1423 = vxor.u32 %v1407, 2147483648
  %v1424 = vxor.u32 %v1408, 2147483648
  %v1425 = vxor.u32 %v1409, 2147483648
  %v1426 = vxor.u32 %v1410, 2147483648
  %v1427 = vxor.u32 %v1411, 2147483648
  %v1428 = vxor.u32 %v1412, 2147483648
  %v1429 = vxor.u32 %v1413, 2147483648
  %v1430 = vmul.f32 %v1414, 1.442695
  %v1431 = vpow.pop %v1430
  %v1432 = vmul.f32 %v1415, 1.442695
  %v1433 = vpow.pop %v1432
  %v1434 = vmul.f32 %v1416, 1.442695
  %v1435 = vpow.pop %v1434
  %v1436 = vmul.f32 %v1417, 1.442695
  %v1437 = vpow.pop %v1436
  %v1438 = vmul.f32 %v1418, 1.442695
  %v1439 = vpow.pop %v1438
  %v1440 = vmul.f32 %v1419, 1.442695
  %v1441 = vpow.pop %v1440
  %v1442 = vmul.f32 %v1420, 1.442695
  %v1443 = vpow.pop %v1442
  %v1444 = vmul.f32 %v1421, 1.442695
  %v1445 = vpow.pop %v1444
  %v1446 = vmul.f32 %v1422, 1.442695
  %v1447 = vpow.pop %v1446
  %v1448 = vmul.f32 %v1423, 1.442695
  %v1449 = vpow.pop %v1448
  %v1450 = vmul.f32 %v1424, 1.442695
  %v1451 = vpow.pop %v1450
  %v1452 = vmul.f32 %v1425, 1.442695
  %v1453 = vpow.pop %v1452
  %v1454 = vmul.f32 %v1426, 1.442695
  %v1455 = vpow.pop %v1454
  %v1456 = vmul.f32 %v1427, 1.442695
  %v1457 = vpow.pop %v1456
  %v1458 = vmul.f32 %v1428, 1.442695
  %v1459 = vpow.pop %v1458
  %v1460 = vmul.f32 %v1429, 1.442695
  %v1461 = vpow.pop %v1460
  %v1462 = vadd.f32 %v1431, 1.0
  %v1463 = vadd.f32 %v1433, 1.0
  %v1464 = vadd.f32 %v1435, 1.0
  %v1465 = vadd.f32 %v1437, 1.0
  %v1466 = vadd.f32 %v1439, 1.0
  %v1467 = vadd.f32 %v1441, 1.0
  %v1468 = vadd.f32 %v1443, 1.0
  %v1469 = vadd.f32 %v1445, 1.0
  %v1470 = vadd.f32 %v1447, 1.0
  %v1471 = vadd.f32 %v1449, 1.0
  %v1472 = vadd.f32 %v1451, 1.0
  %v1473 = vadd.f32 %v1453, 1.0
  %v1474 = vadd.f32 %v1455, 1.0
  %v1475 = vadd.f32 %v1457, 1.0
  %v1476 = vadd.f32 %v1459, 1.0
  %v1477 = vadd.f32 %v1461, 1.0
  %v1478 = vrcp.pop %v1462
  %v1479 = vmul.f32 %v1462, %v1478
  %v1480 = vsub.f32 1.0, %v1479
  %v1481 = vmul.f32 %v1478, %v1480
  %v1482 = vadd.f32 %v1478, %v1481
  %vm1483 = vweird.f32 %v1462
  %vm1484 = vweird.f32 %v1478
  %vm1485 = vmor %vm1483, %vm1484
  %v1486 = vsel %vm1485, %v1478, %v1482
  %v1487 = vand.u32 2147483647, %v1462
  %vm1488 = vcmp.eq.f32.partialorder %v1487, 8.507059e+37
  %v1489 = vand.u32 %v1462, 2147483648
  %v1490 = vor.u32 1.1754944e-38, %v1489
  %v1491 = vsel %vm1488, %v1490, %v1486
  %v1492 = vmul.f32 1.0, %v1491
  %v1493 = vrcp.pop %v1463
  %v1494 = vmul.f32 %v1463, %v1493
  %v1495 = vsub.f32 1.0, %v1494
  %v1496 = vmul.f32 %v1493, %v1495
  %v1497 = vadd.f32 %v1493, %v1496
  %vm1498 = vweird.f32 %v1463
  %vm1499 = vweird.f32 %v1493
  %vm1500 = vmor %vm1498, %vm1499
  %v1501 = vsel %vm1500, %v1493, %v1497
  %v1502 = vand.u32 2147483647, %v1463
  %vm1503 = vcmp.eq.f32.partialorder %v1502, 8.507059e+37
  %v1504 = vand.u32 %v1463, 2147483648
  %v1505 = vor.u32 1.1754944e-38, %v1504
  %v1506 = vsel %vm1503, %v1505, %v1501
  %v1507 = vmul.f32 1.0, %v1506
  %v1508 = vrcp.pop %v1464
  %v1509 = vmul.f32 %v1464, %v1508
  %v1510 = vsub.f32 1.0, %v1509
  %v1511 = vmul.f32 %v1508, %v1510
  %v1512 = vadd.f32 %v1508, %v1511
  %vm1513 = vweird.f32 %v1464
  %vm1514 = vweird.f32 %v1508
  %vm1515 = vmor %vm1513, %vm1514
  %v1516 = vsel %vm1515, %v1508, %v1512
  %v1517 = vand.u32 2147483647, %v1464
  %vm1518 = vcmp.eq.f32.partialorder %v1517, 8.507059e+37
  %v1519 = vand.u32 %v1464, 2147483648
  %v1520 = vor.u32 1.1754944e-38, %v1519
  %v1521 = vsel %vm1518, %v1520, %v1516
  %v1522 = vmul.f32 1.0, %v1521
  %v1523 = vrcp.pop %v1465
  %v1524 = vmul.f32 %v1465, %v1523
  %v1525 = vsub.f32 1.0, %v1524
  %v1526 = vmul.f32 %v1523, %v1525
  %v1527 = vadd.f32 %v1523, %v1526
  %vm1528 = vweird.f32 %v1465
  %vm1529 = vweird.f32 %v1523
  %vm1530 = vmor %vm1528, %vm1529
  %v1531 = vsel %vm1530, %v1523, %v1527
  %v1532 = vand.u32 2147483647, %v1465
  %vm1533 = vcmp.eq.f32.partialorder %v1532, 8.507059e+37
  %v1534 = vand.u32 %v1465, 2147483648
  %v1535 = vor.u32 1.1754944e-38, %v1534
  %v1536 = vsel %vm1533, %v1535, %v1531
  %v1537 = vmul.f32 1.0, %v1536
  %v1538 = vrcp.pop %v1466
  %v1539 = vmul.f32 %v1466, %v1538
  %v1540 = vsub.f32 1.0, %v1539
  %v1541 = vmul.f32 %v1538, %v1540
  %v1542 = vadd.f32 %v1538, %v1541
  %vm1543 = vweird.f32 %v1466
  %vm1544 = vweird.f32 %v1538
  %vm1545 = vmor %vm1543, %vm1544
  %v1546 = vsel %vm1545, %v1538, %v1542
  %v1547 = vand.u32 2147483647, %v1466
  %vm1548 = vcmp.eq.f32.partialorder %v1547, 8.507059e+37
  %v1549 = vand.u32 %v1466, 2147483648
  %v1550 = vor.u32 1.1754944e-38, %v1549
  %v1551 = vsel %vm1548, %v1550, %v1546
  %v1552 = vmul.f32 1.0, %v1551
  %v1553 = vrcp.pop %v1467
  %v1554 = vmul.f32 %v1467, %v1553
  %v1555 = vsub.f32 1.0, %v1554
  %v1556 = vmul.f32 %v1553, %v1555
  %v1557 = vadd.f32 %v1553, %v1556
  %vm1558 = vweird.f32 %v1467
  %vm1559 = vweird.f32 %v1553
  %vm1560 = vmor %vm1558, %vm1559
  %v1561 = vsel %vm1560, %v1553, %v1557
  %v1562 = vand.u32 2147483647, %v1467
  %vm1563 = vcmp.eq.f32.partialorder %v1562, 8.507059e+37
  %v1564 = vand.u32 %v1467, 2147483648
  %v1565 = vor.u32 1.1754944e-38, %v1564
  %v1566 = vsel %vm1563, %v1565, %v1561
  %v1567 = vmul.f32 1.0, %v1566
  %v1568 = vrcp.pop %v1468
  %v1569 = vmul.f32 %v1468, %v1568
  %v1570 = vsub.f32 1.0, %v1569
  %v1571 = vmul.f32 %v1568, %v1570
  %v1572 = vadd.f32 %v1568, %v1571
  %vm1573 = vweird.f32 %v1468
  %vm1574 = vweird.f32 %v1568
  %vm1575 = vmor %vm1573, %vm1574
  %v1576 = vsel %vm1575, %v1568, %v1572
  %v1577 = vand.u32 2147483647, %v1468
  %vm1578 = vcmp.eq.f32.partialorder %v1577, 8.507059e+37
  %v1579 = vand.u32 %v1468, 2147483648
  %v1580 = vor.u32 1.1754944e-38, %v1579
  %v1581 = vsel %vm1578, %v1580, %v1576
  %v1582 = vmul.f32 1.0, %v1581
  %v1583 = vrcp.pop %v1469
  %v1584 = vmul.f32 %v1469, %v1583
  %v1585 = vsub.f32 1.0, %v1584
  %v1586 = vmul.f32 %v1583, %v1585
  %v1587 = vadd.f32 %v1583, %v1586
  %vm1588 = vweird.f32 %v1469
  %vm1589 = vweird.f32 %v1583
  %vm1590 = vmor %vm1588, %vm1589
  %v1591 = vsel %vm1590, %v1583, %v1587
  %v1592 = vand.u32 2147483647, %v1469
  %vm1593 = vcmp.eq.f32.partialorder %v1592, 8.507059e+37
  %v1594 = vand.u32 %v1469, 2147483648
  %v1595 = vor.u32 1.1754944e-38, %v1594
  %v1596 = vsel %vm1593, %v1595, %v1591
  %v1597 = vmul.f32 1.0, %v1596
  %v1598 = vrcp.pop %v1470
  %v1599 = vmul.f32 %v1470, %v1598
  %v1600 = vsub.f32 1.0, %v1599
  %v1601 = vmul.f32 %v1598, %v1600
  %v1602 = vadd.f32 %v1598, %v1601
  %vm1603 = vweird.f32 %v1470
  %vm1604 = vweird.f32 %v1598
  %vm1605 = vmor %vm1603, %vm1604
  %v1606 = vsel %vm1605, %v1598, %v1602
  %v1607 = vand.u32 2147483647, %v1470
  %vm1608 = vcmp.eq.f32.partialorder %v1607, 8.507059e+37
  %v1609 = vand.u32 %v1470, 2147483648
  %v1610 = vor.u32 1.1754944e-38, %v1609
  %v1611 = vsel %vm1608, %v1610, %v1606
  %v1612 = vmul.f32 1.0, %v1611
  %v1613 = vrcp.pop %v1471
  %v1614 = vmul.f32 %v1471, %v1613
  %v1615 = vsub.f32 1.0, %v1614
  %v1616 = vmul.f32 %v1613, %v1615
  %v1617 = vadd.f32 %v1613, %v1616
  %vm1618 = vweird.f32 %v1471
  %vm1619 = vweird.f32 %v1613
  %vm1620 = vmor %vm1618, %vm1619
  %v1621 = vsel %vm1620, %v1613, %v1617
  %v1622 = vand.u32 2147483647, %v1471
  %vm1623 = vcmp.eq.f32.partialorder %v1622, 8.507059e+37
  %v1624 = vand.u32 %v1471, 2147483648
  %v1625 = vor.u32 1.1754944e-38, %v1624
  %v1626 = vsel %vm1623, %v1625, %v1621
  %v1627 = vmul.f32 1.0, %v1626
  %v1628 = vrcp.pop %v1472
  %v1629 = vmul.f32 %v1472, %v1628
  %v1630 = vsub.f32 1.0, %v1629
  %v1631 = vmul.f32 %v1628, %v1630
  %v1632 = vadd.f32 %v1628, %v1631
  %vm1633 = vweird.f32 %v1472
  %vm1634 = vweird.f32 %v1628
  %vm1635 = vmor %vm1633, %vm1634
  %v1636 = vsel %vm1635, %v1628, %v1632
  %v1637 = vand.u32 2147483647, %v1472
  %vm1638 = vcmp.eq.f32.partialorder %v1637, 8.507059e+37
  %v1639 = vand.u32 %v1472, 2147483648
  %v1640 = vor.u32 1.1754944e-38, %v1639
  %v1641 = vsel %vm1638, %v1640, %v1636
  %v1642 = vmul.f32 1.0, %v1641
  %v1643 = vrcp.pop %v1473
  %v1644 = vmul.f32 %v1473, %v1643
  %v1645 = vsub.f32 1.0, %v1644
  %v1646 = vmul.f32 %v1643, %v1645
  %v1647 = vadd.f32 %v1643, %v1646
  %vm1648 = vweird.f32 %v1473
  %vm1649 = vweird.f32 %v1643
  %vm1650 = vmor %vm1648, %vm1649
  %v1651 = vsel %vm1650, %v1643, %v1647
  %v1652 = vand.u32 2147483647, %v1473
  %vm1653 = vcmp.eq.f32.partialorder %v1652, 8.507059e+37
  %v1654 = vand.u32 %v1473, 2147483648
  %v1655 = vor.u32 1.1754944e-38, %v1654
  %v1656 = vsel %vm1653, %v1655, %v1651
  %v1657 = vmul.f32 1.0, %v1656
  %v1658 = vrcp.pop %v1474
  %v1659 = vmul.f32 %v1474, %v1658
  %v1660 = vsub.f32 1.0, %v1659
  %v1661 = vmul.f32 %v1658, %v1660
  %v1662 = vadd.f32 %v1658, %v1661
  %vm1663 = vweird.f32 %v1474
  %vm1664 = vweird.f32 %v1658
  %vm1665 = vmor %vm1663, %vm1664
  %v1666 = vsel %vm1665, %v1658, %v1662
  %v1667 = vand.u32 2147483647, %v1474
  %vm1668 = vcmp.eq.f32.partialorder %v1667, 8.507059e+37
  %v1669 = vand.u32 %v1474, 2147483648
  %v1670 = vor.u32 1.1754944e-38, %v1669
  %v1671 = vsel %vm1668, %v1670, %v1666
  %v1672 = vmul.f32 1.0, %v1671
  %v1673 = vrcp.pop %v1475
  %v1674 = vmul.f32 %v1475, %v1673
  %v1675 = vsub.f32 1.0, %v1674
  %v1676 = vmul.f32 %v1673, %v1675
  %v1677 = vadd.f32 %v1673, %v1676
  %vm1678 = vweird.f32 %v1475
  %vm1679 = vweird.f32 %v1673
  %vm1680 = vmor %vm1678, %vm1679
  %v1681 = vsel %vm1680, %v1673, %v1677
  %v1682 = vand.u32 2147483647, %v1475
  %vm1683 = vcmp.eq.f32.partialorder %v1682, 8.507059e+37
  %v1684 = vand.u32 %v1475, 2147483648
  %v1685 = vor.u32 1.1754944e-38, %v1684
  %v1686 = vsel %vm1683, %v1685, %v1681
  %v1687 = vmul.f32 1.0, %v1686
  %v1688 = vrcp.pop %v1476
  %v1689 = vmul.f32 %v1476, %v1688
  %v1690 = vsub.f32 1.0, %v1689
  %v1691 = vmul.f32 %v1688, %v1690
  %v1692 = vadd.f32 %v1688, %v1691
  %vm1693 = vweird.f32 %v1476
  %vm1694 = vweird.f32 %v1688
  %vm1695 = vmor %vm1693, %vm1694
  %v1696 = vsel %vm1695, %v1688, %v1692
  %v1697 = vand.u32 2147483647, %v1476
  %vm1698 = vcmp.eq.f32.partialorder %v1697, 8.507059e+37
  %v1699 = vand.u32 %v1476, 2147483648
  %v1700 = vor.u32 1.1754944e-38, %v1699
  %v1701 = vsel %vm1698, %v1700, %v1696
  %v1702 = vmul.f32 1.0, %v1701
  %v1703 = vrcp.pop %v1477
  %v1704 = vmul.f32 %v1477, %v1703
  %v1705 = vsub.f32 1.0, %v1704
  %v1706 = vmul.f32 %v1703, %v1705
  %v1707 = vadd.f32 %v1703, %v1706
  %vm1708 = vweird.f32 %v1477
  %vm1709 = vweird.f32 %v1703
  %vm1710 = vmor %vm1708, %vm1709
  %v1711 = vsel %vm1710, %v1703, %v1707
  %v1712 = vand.u32 2147483647, %v1477
  %vm1713 = vcmp.eq.f32.partialorder %v1712, 8.507059e+37
  %v1714 = vand.u32 %v1477, 2147483648
  %v1715 = vor.u32 1.1754944e-38, %v1714
  %v1716 = vsel %vm1713, %v1715, %v1711
  %v1717 = vmul.f32 1.0, %v1716
  %v1734 = vlaneseq
  %v1735 = vand.u32 %v1734, 127
  %v1736 = vperm.slane %v1492, %v1735
  %v1737 = vadd.s32 %v1735, 4294967288
  %v1738 = vperm.slane %v1507, %v1737
  %vm1739 = vcmask 130112
  %v1740 = vsel %vm1739, %v1738, %v1736
  %v1741 = vadd.s32 %v1735, 4294967280
  %v1742 = vperm.slane %v1522, %v1741
  %vm1743 = vcmask 195712
  %v1744 = vsel %vm1743, %v1742, %v1740
  %v1745 = vadd.s32 %v1735, 4294967272
  %v1746 = vperm.slane %v1537, %v1745
  %vm1747 = vcmask 261312
  %v1748 = vsel %vm1747, %v1746, %v1744
  %v1749 = vadd.s32 %v1735, 4294967264
  %v1750 = vperm.slane %v1552, %v1749
  %vm1751 = vcmask 326912
  %v1752 = vsel %vm1751, %v1750, %v1748
  %v1753 = vadd.s32 %v1735, 4294967256
  %v1754 = vperm.slane %v1567, %v1753
  %vm1755 = vcmask 392512
  %v1756 = vsel %vm1755, %v1754, %v1752
  %v1757 = vadd.s32 %v1735, 4294967248
  %v1758 = vperm.slane %v1582, %v1757
  %vm1759 = vcmask 458112
  %v1760 = vsel %vm1759, %v1758, %v1756
  %v1761 = vadd.s32 %v1735, 4294967240
  %v1762 = vperm.slane %v1597, %v1761
  %vm1763 = vcmask 523712
  %v1764 = vsel %vm1763, %v1762, %v1760
  %v1765 = vadd.s32 %v1735, 4294967232
  %v1766 = vperm.slane %v1612, %v1765
  %vm1767 = vcmask 589312
  %v1768 = vsel %vm1767, %v1766, %v1764
  %v1769 = vadd.s32 %v1735, 4294967224
  %v1770 = vperm.slane %v1627, %v1769
  %vm1771 = vcmask 654912
  %v1772 = vsel %vm1771, %v1770, %v1768
  %v1773 = vadd.s32 %v1735, 4294967216
  %v1774 = vperm.slane %v1642, %v1773
  %vm1775 = vcmask 720512
  %v1776 = vsel %vm1775, %v1774, %v1772
  %v1777 = vadd.s32 %v1735, 4294967208
  %v1778 = vperm.slane %v1657, %v1777
  %vm1779 = vcmask 786112
  %v1780 = vsel %vm1779, %v1778, %v1776
  %v1781 = vadd.s32 %v1735, 4294967200
  %v1782 = vperm.slane %v1672, %v1781
  %vm1783 = vcmask 851712
  %v1784 = vsel %vm1783, %v1782, %v1780
  %v1785 = vadd.s32 %v1735, 4294967192
  %v1786 = vperm.slane %v1687, %v1785
  %vm1787 = vcmask 917312
  %v1788 = vsel %vm1787, %v1786, %v1784
  %v1789 = vadd.s32 %v1735, 4294967184
  %v1790 = vperm.slane %v1702, %v1789
  %vm1791 = vcmask 982912
  %v1792 = vsel %vm1791, %v1790, %v1788
  %v1793 = vadd.s32 %v1735, 4294967176
  %v1794 = vperm.slane %v1717, %v1793
  %vm1795 = vcmask 1048512
  %v1796 = vsel %vm1795, %v1794, %v1792
  %1798 = vst [vmem:[%s7] sm:$0x1] %v1796
  // Predicated region
  $region30: #{gnn_recommender_forward.1} parent=0 // pred_check
    _
  $region31: #{gnn_recommender_forward.1} parent=0 // pred_check_branch
    %1800 = sbr.rel (0) target = $region33
  $region32: #{gnn_recommender_forward.1} parent=0 // pred_region
    _
  $region33: #{gnn_recommender_forward.1} parent=0 // pred_fallthru
    _
  // Predicated region
  $region34: #{gnn_recommender_forward.1} parent=0 // pred_check
    _
  $region35: #{gnn_recommender_forward.1} parent=0 // pred_check_branch
    %1802 = sbr.rel (0) target = $region37
  $region36: #{gnn_recommender_forward.1} parent=0 // pred_region
    _
  $region37: #{gnn_recommender_forward.1} parent=0 // pred_fallthru
    _

</llo_original>
